<compile_context>
chip_gen: v7x
topology: tpu7x:2x2x1
jax: 0.10.0
libtpu: 0.0.40
codegen_flags: <defaults>
</compile_context>

<pallas_src>
import functools

import jax
import jax.numpy as jnp
from jax.experimental import pallas as pl
from jax.experimental.pallas import tpu as pltpu


# ---------------------------------------------------------------------------
# In-kernel element-wise helpers
# ---------------------------------------------------------------------------
def _scale_max_min(x):
    # Exact element-wise division (matches torch): the max pixel maps to
    # exactly 1.0, so the HSV conversion intentionally leaves it grey
    # (h_category == 6 matches no branch) exactly like the reference.
    # No epsilon: constant planes -> inf/nan, same as torch.
    x_min = jnp.min(x)
    x_max = jnp.max(x)
    return (x - x_min) / (x_max - x_min)


def _hsv_to_rgb_v1(h, s):
    # hsv -> rgb specialised to v == 1 (the module always passes v = ones):
    #   c = s * v = s,  m = v - c = 1 - s   (drops the multiplies by ones).
    c = s
    m = 1.0 - s
    dh = h * 6.0
    h_cat = dh.astype(jnp.int32)      # truncation == torch int32 cast (h >= 0)
    x = c * (1.0 - jnp.abs(jnp.mod(dh, 2.0) - 1.0))
    zeros = jnp.zeros_like(h)
    rr, gg, bb = zeros, zeros, zeros
    m0 = h_cat == 0
    rr = jnp.where(m0, c, rr)
    gg = jnp.where(m0, x, gg)
    m1 = h_cat == 1
    rr = jnp.where(m1, x, rr)
    gg = jnp.where(m1, c, gg)
    m2 = h_cat == 2
    gg = jnp.where(m2, c, gg)
    bb = jnp.where(m2, x, bb)
    m3 = h_cat == 3
    gg = jnp.where(m3, x, gg)
    bb = jnp.where(m3, c, bb)
    m4 = h_cat == 4
    rr = jnp.where(m4, x, rr)
    bb = jnp.where(m4, c, bb)
    m5 = h_cat == 5
    rr = jnp.where(m5, c, rr)
    bb = jnp.where(m5, x, bb)
    # h == 1.0 exactly -> h_cat == 6 -> grey pixel, matching torch.
    return rr + m, gg + m, bb + m


# ---------------------------------------------------------------------------
# Pallas kernel: one (batch, scale) pair per grid cell (both axes parallel)
# ---------------------------------------------------------------------------
def _monogenic_kernel(s6_ref, filt_ref, hblk2_ref, cw_ref, sw_ref, o_ref, *,
                      mode, mxu_dtype, flat_out):
    H = hblk2_ref.shape[0] // 2
    W = cw_ref.shape[0]
    s_idx = pl.program_id(1)

    def dot(a, b):
        return jnp.dot(a.astype(mxu_dtype), b.astype(mxu_dtype),
                       preferred_element_type=jnp.float32)

    # Packed, filtered spectra: (6H, W) = per-spectrum [Yr_k; Yi_k] blocks for
    # the three monogenic components k = (f, riesz-h1, riesz-h2).
    # 1/(H*W) is already folded into the (VMEM-resident) filter bank.
    y = filt_ref[s_idx] * s6_ref[0]

    # Fused H-side inverse DFT per spectrum:
    #   [Gr_k; Gi_k] = [[Ch, -Sh], [Sh, Ch]] @ [Yr_k; Yi_k]
    hblk2 = hblk2_ref[...]                                     # (2H, 2H)
    g = [dot(hblk2, y[2 * k * H:(2 * k + 2) * H]) for k in range(3)]

    # Regroup real / imag halves so the W-side is two fat (3H,W)x(W,W) dots
    # (sublane-only slicing / concatenation).
    gr = jnp.concatenate([gk[0:H] for gk in g], axis=0)        # (3H, W)
    gi = jnp.concatenate([gk[H:2 * H] for gk in g], axis=0)    # (3H, W)

    # W-side inverse DFT:  out = Gr @ Cw - Gi @ Sw   -> [f; h1; h2]
    fh = dot(gr, cw_ref[...]) - dot(gi, sw_ref[...])           # (3H, W)

    f = fh[0:H]
    h1 = fh[H:2 * H]
    h2 = fh[2 * H:3 * H]

    fr = jnp.sqrt(h1 * h1 + h2 * h2) + 1e-6
    ft = jnp.arctan2(f, fr)

    if flat_out:
        def emit(ch, val):
            o_ref[0, ch, 0] = val.reshape(H * W)       # lane-dense store
    else:
        def emit(ch, val):
            o_ref[0, ch] = val

    if mode == "ft":
        # default module configuration (all return_* flags are None)
        emit(0, ft)
    else:  # mode == "rgb"  (return_rgb=True branch)
        ori = jnp.arctan(-h2 / (h1 + 1e-6))
        fts = _scale_max_min(ft)
        oris = _scale_max_min(ori)
        frs = _scale_max_min(fr)
        ro, go, bo = _hsv_to_rgb_v1(oris, frs)
        rv, gv, bv = _hsv_to_rgb_v1(fts, frs)
        # torch.cat([rgb_o, rgb_v], dim=1) channel order
        for ch, val in enumerate((ro, go, bo, rv, gv, bv)):
            emit(ch, val)
    # TODO(synk): return_hsv / return_phase_orientation branches not wired
    # (trivial output-packing variants of the quantities computed above).


# ---------------------------------------------------------------------------
# Plain-JAX glue: parameter -> frequency-domain filters (monogenic_scale)
# ---------------------------------------------------------------------------
def _build_filters(sigma, wave_lengths, H, W):
    f32 = jnp.float32
    fy = jnp.fft.fftfreq(H).astype(f32)          # varies along H (dim -2)
    fx = jnp.fft.fftfreq(W).astype(f32)          # varies along W (dim -1)
    u1 = jnp.broadcast_to(fy[:, None], (H, W))
    u2 = jnp.broadcast_to(fx[None, :], (H, W))
    radius = jnp.sqrt(u1 * u1 + u2 * u2)

    qs = radius.at[0, 0].set(1.0)
    u1n = u1 / qs                                 # h1 = i * u1n
    u2n = u2 / qs                                 # h2 = i * u2n

    lp = (1.0 / (1.0 + (radius / 0.45) ** 30.0)).astype(f32)
    radius_lg = radius.at[0, 0].set(1.0)

    c = jax.nn.sigmoid(sigma.astype(f32))
    denom = 2.0 * jnp.log(c) ** 2.0
    wl = jax.nn.relu(wave_lengths.astype(f32))
    fo = 1.0 / (wl.reshape(-1, 1, 1) + 1e-5)      # (nscale, 1, 1)
    lrof = jnp.log(radius_lg[None, :, :] / fo)
    lg = lp[None] * jnp.exp(-(lrof * lrof) / denom)   # (nscale, H, W)
    mh1 = lg * u1n[None]
    mh2 = lg * u2n[None]
    return lg, mh1, mh2


def _dft_mats(N):
    # F = C - i*S ; angle reduced mod N for f32 accuracy.  C and S symmetric.
    idx = jnp.arange(N)
    ang = (2.0 * jnp.pi / N) * jnp.mod(jnp.outer(idx, idx), N).astype(jnp.float32)
    return jnp.cos(ang).astype(jnp.float32), jnp.sin(ang).astype(jnp.float32)


def _vmem_limit(bytes_needed):
    limit = max(int(bytes_needed), 32 * 1024 * 1024)
    try:
        cap = int(pltpu.get_tpu_info().vmem_capacity_bytes)
    except Exception:
        cap = 64 * 1024 * 1024          # v7x-safe assumption
    return min(limit, (cap * 7) // 8)


# ---------------------------------------------------------------------------
# Forward wrapper
# ---------------------------------------------------------------------------
def monogenic_forward(x, sigma, wave_lengths, *, return_rgb=False,
                      mxu_dtype=jnp.float32):
    B, C, H, W = x.shape
    nscale = wave_lengths.shape[0]
    f32 = jnp.float32

    # Channel mean + forward FFT depend only on the batch index, so they are
    # done once in the wrapper (XLA).  The kernel then only runs the per-scale
    # filtered inverse transform -> every grid step is uniform, no scratch
    # carry, both grid axes parallel.
    xm = jnp.mean(x.astype(f32), axis=1)                        # (B, H, W)
    X = jnp.fft.fft2(xm)
    Xr = jnp.real(X).astype(f32)
    Xi = jnp.imag(X).astype(f32)

    # Packed spectra, per-spectrum [Yr; Yi] pairs stacked along sublanes:
    #   f : Y = lg *(Xr+iXi)    -> Yr =  lg*Xr , Yi =  lg*Xi
    #   h1: Y = i*mh1*(Xr+iXi)  -> Yr = -mh1*Xi, Yi =  mh1*Xr
    #   h2: Y = i*mh2*(Xr+iXi)  -> Yr = -mh2*Xi, Yi =  mh2*Xr
    s6 = jnp.concatenate([Xr, Xi, -Xi, Xr, -Xi, Xr], axis=1)    # (B, 6H, W)

    lg, mh1, mh2 = _build_filters(sigma, wave_lengths, H, W)
    inv_hw = 1.0 / float(H * W)                                 # fold ifft2 norm
    filt6 = jnp.concatenate([lg, lg, mh1, mh1, mh2, mh2], axis=1) * inv_hw

    CH, SH = _dft_mats(H)
    CW, SW = _dft_mats(W)
    hblk2 = jnp.block([[CH, -SH], [SH, CH]])                    # (2H, 2H)

    mode = "rgb" if return_rgb else "ft"
    out_ch = 6 if return_rgb else 1
    # Lane-dense output is only worthwhile (and legal) when W is narrower than
    # a lane register and the flattened plane is 128-aligned.
    flat_ok = (W < 128) and ((H * W) % 128 == 0)

    bpe = 4
    const_bytes = (nscale * 6 * H * W + 4 * H * H + 2 * W * W) * bpe
    stream_bytes = (2 * 6 * H * W + 2 * out_ch * H * W) * bpe   # double-buffered
    work_bytes = 32 * H * W * bpe                               # intermediates
    vmem_limit = _vmem_limit(2 * const_bytes + stream_bytes + work_bytes
                             + (8 << 20))

    cost = pl.CostEstimate(
        flops=int(B * nscale * (3 * 2 * (2 * H) * (2 * H) * W
                                + 2 * 2 * (3 * H) * W * W)),
        transcendentals=int(B * nscale * H * W * (2 if mode == "ft" else 6)),
        bytes_accessed=int(bpe * (B * 6 * H * W + nscale * 6 * H * W
                                  + 4 * H * H + 2 * W * W
                                  + B * nscale * out_ch * H * W)))

    def build(flat, single_buffer_consts):
        # Constant inputs (filter bank + DFT matrices) have constant index
        # maps -> fetched once; Buffered(1) additionally avoids a second copy.
        ck = ({"pipeline_mode": pl.Buffered(1)}
              if single_buffer_consts else {})
        if flat:
            out_shape = jax.ShapeDtypeStruct((B, nscale * out_ch, 1, H * W), f32)
            out_spec = pl.BlockSpec((1, out_ch, 1, H * W),
                                    lambda b, s: (b, s, 0, 0))
        else:
            out_shape = jax.ShapeDtypeStruct((B, nscale * out_ch, H, W), f32)
            out_spec = pl.BlockSpec((1, out_ch, H, W),
                                    lambda b, s: (b, s, 0, 0))
        kernel = functools.partial(_monogenic_kernel, mode=mode,
                                   mxu_dtype=mxu_dtype, flat_out=flat)
        grid_spec = pltpu.PrefetchScalarGridSpec(
            num_scalar_prefetch=0,
            grid=(B, nscale),
            in_specs=[
                pl.BlockSpec((1, 6 * H, W), lambda b, s: (b, 0, 0)),   # spectra
                pl.BlockSpec((nscale, 6 * H, W),                       # filters
                             lambda b, s: (0, 0, 0), **ck),            # (resident)
                pl.BlockSpec((2 * H, 2 * H), lambda b, s: (0, 0), **ck),  # H block
                pl.BlockSpec((W, W), lambda b, s: (0, 0), **ck),          # C_W
                pl.BlockSpec((W, W), lambda b, s: (0, 0), **ck),          # S_W
            ],
            out_specs=out_spec,
        )
        return pl.pallas_call(
            kernel,
            out_shape=out_shape,
            grid_spec=grid_spec,
            compiler_params=pltpu.CompilerParams(
                dimension_semantics=("parallel", "parallel"),
                vmem_limit_bytes=vmem_limit),
            cost_estimate=cost,
        )

    args = (s6, filt6, hblk2, CW, SW)
    attempts = []
    if flat_ok:
        attempts += [(True, True), (True, False)]
    attempts += [(False, True), (False, False)]

    out = None
    last_err = None
    for flat, buf1 in attempts:
        try:
            out = build(flat, buf1)(*args)
            break
        except Exception as e:          # lowering / pipeline-mode fallback
            last_err = e
            out = None
    if out is None:
        raise last_err
    return out.reshape(B, nscale * out_ch, H, W)


# ---------------------------------------------------------------------------
# Pure-JAX reference (default "ft" path) using jnp.fft, for verification
# ---------------------------------------------------------------------------
def _reference_ft(x, sigma, wave_lengths):
    lg, mh1, mh2 = _build_filters(sigma, wave_lengths, x.shape[2], x.shape[3])
    xm = jnp.mean(x, axis=1, keepdims=True)                 # (B, 1, H, W)
    im = jnp.fft.fft2(xm)
    f = jnp.real(jnp.fft.ifft2(im * lg.astype(jnp.complex64)))
    h1 = jnp.real(jnp.fft.ifft2(im * (1j * mh1).astype(jnp.complex64)))
    h2 = jnp.real(jnp.fft.ifft2(im * (1j * mh2).astype(jnp.complex64)))
    fr = jnp.sqrt(h1 * h1 + h2 * h2) + 1e-6
    return jnp.arctan2(f, fr)                                # (B, nscale, H, W)


if __name__ == "__main__":
    key = jax.random.PRNGKey(0)
    B, C, H, W = 2, 4, 16, 16
    nscale = 3
    x = jax.random.normal(key, (B, C, H, W), dtype=jnp.float32)

    # deterministic parameter init (module's non-trainable defaults)
    sigma = jnp.asarray(-0.4055, dtype=jnp.float32)
    wave_lengths = jnp.asarray([[10.0 * (1.7 ** i)] for i in range(nscale)],
                               dtype=jnp.float32)

    # default configuration (all return_* flags None) -> ft output
    out_ft = jax.block_until_ready(
        monogenic_forward(x, sigma, wave_lengths, return_rgb=False))
    assert out_ft.shape == (B, nscale, H, W)
    ref = _reference_ft(x, sigma, wave_lengths)
    max_err = float(jnp.max(jnp.abs(out_ft - ref)))
    # The inverse path is a dense f32 DFT; the tolerance slack is atan2
    # amplification where f and fr are simultaneously near zero, not DFT error.
    assert max_err < 1e-2, f"mismatch vs jnp.fft reference: {max_err}"

    # return_rgb=True configuration
    out_rgb = jax.block_until_ready(
        monogenic_forward(x, sigma, wave_lengths, return_rgb=True))
    assert out_rgb.shape == (B, nscale * 6, H, W)
    assert bool(jnp.all(jnp.isfinite(out_rgb)))

    print("KERNEL_OK")
</pallas_src>

<mosaic_0001>
module attributes {stable_mosaic.version = 11 : i64} {
  func.func @_monogenic_kernel(%arg0: i32, %arg1: i32, %arg2: memref<1x96x16xf32, #tpu.memory_space<vmem>>, %arg3: memref<3x96x16xf32, #tpu.memory_space<vmem>>, %arg4: memref<32x32xf32, #tpu.memory_space<vmem>>, %arg5: memref<16x16xf32, #tpu.memory_space<vmem>>, %arg6: memref<16x16xf32, #tpu.memory_space<vmem>>, %arg7: memref<1x1x1x256xf32, #tpu.memory_space<vmem>>) attributes {dimension_semantics = [#tpu.dimension_semantics<parallel>, #tpu.dimension_semantics<parallel>], iteration_bounds = array<i64: 2, 3>, scalar_prefetch = 0 : i64, scratch_operands = 0 : i64, tpu.core_type = #tpu.core_type<tc>, window_params = [{transform_indices = @transform_0, window_bounds = array<i64: 1, 96, 16>}, {pipeline_mode = #tpu.pipeline_mode<synchronous>, transform_indices = @transform_1, window_bounds = array<i64: 3, 96, 16>}, {pipeline_mode = #tpu.pipeline_mode<synchronous>, transform_indices = @transform_2, window_bounds = array<i64: 32, 32>}, {pipeline_mode = #tpu.pipeline_mode<synchronous>, transform_indices = @transform_3, window_bounds = array<i64: 16, 16>}, {pipeline_mode = #tpu.pipeline_mode<synchronous>, transform_indices = @transform_4, window_bounds = array<i64: 16, 16>}, {transform_indices = @transform_5, window_bounds = array<i64: 1, 1, 1, 256>}]} {
    %0 = arith.index_cast %arg1 : i32 to index
    %c0 = arith.constant 0 : index
    %c0_0 = arith.constant 0 : index
    %1 = vector.load %arg3[%0, %c0, %c0_0] : memref<3x96x16xf32, #tpu.memory_space<vmem>>, vector<1x96x16xf32>
    %2 = vector.shape_cast %1 : vector<1x96x16xf32> to vector<96x16xf32>
    %c0_1 = arith.constant 0 : index
    %c0_2 = arith.constant 0 : index
    %c0_3 = arith.constant 0 : index
    %3 = vector.load %arg2[%c0_1, %c0_2, %c0_3] : memref<1x96x16xf32, #tpu.memory_space<vmem>>, vector<1x96x16xf32>
    %4 = vector.shape_cast %3 : vector<1x96x16xf32> to vector<96x16xf32>
    %5 = arith.mulf %2, %4 : vector<96x16xf32>
    %c0_4 = arith.constant 0 : index
    %c0_5 = arith.constant 0 : index
    %6 = vector.load %arg4[%c0_4, %c0_5] : memref<32x32xf32, #tpu.memory_space<vmem>>, vector<32x32xf32>
    %7 = vector.extract_strided_slice %5 {offsets = [0, 0], sizes = [32, 16], strides = [1, 1]} : vector<96x16xf32> to vector<32x16xf32>
    %cst = arith.constant dense<0.000000e+00> : vector<32x16xf32>
    %8 = tpu.matmul %6, %7, %cst {dimension_numbers = #tpu.dot_dimension_numbers<[1], [0], [0], [1], [0, 0, 1, 1], [], []>} : vector<32x32xf32>, vector<32x16xf32>, vector<32x16xf32> -> vector<32x16xf32>
    %9 = vector.extract_strided_slice %5 {offsets = [32, 0], sizes = [32, 16], strides = [1, 1]} : vector<96x16xf32> to vector<32x16xf32>
    %cst_6 = arith.constant dense<0.000000e+00> : vector<32x16xf32>
    %10 = tpu.matmul %6, %9, %cst_6 {dimension_numbers = #tpu.dot_dimension_numbers<[1], [0], [0], [1], [0, 0, 1, 1], [], []>} : vector<32x32xf32>, vector<32x16xf32>, vector<32x16xf32> -> vector<32x16xf32>
    %11 = vector.extract_strided_slice %5 {offsets = [64, 0], sizes = [32, 16], strides = [1, 1]} : vector<96x16xf32> to vector<32x16xf32>
    %cst_7 = arith.constant dense<0.000000e+00> : vector<32x16xf32>
    %12 = tpu.matmul %6, %11, %cst_7 {dimension_numbers = #tpu.dot_dimension_numbers<[1], [0], [0], [1], [0, 0, 1, 1], [], []>} : vector<32x32xf32>, vector<32x16xf32>, vector<32x16xf32> -> vector<32x16xf32>
    %13 = vector.extract_strided_slice %8 {offsets = [0, 0], sizes = [16, 16], strides = [1, 1]} : vector<32x16xf32> to vector<16x16xf32>
    %14 = vector.extract_strided_slice %10 {offsets = [0, 0], sizes = [16, 16], strides = [1, 1]} : vector<32x16xf32> to vector<16x16xf32>
    %15 = vector.extract_strided_slice %12 {offsets = [0, 0], sizes = [16, 16], strides = [1, 1]} : vector<32x16xf32> to vector<16x16xf32>
    %16 = tpu.concatenate %13, %14, %15 in 0 : vector<16x16xf32>, vector<16x16xf32>, vector<16x16xf32> -> vector<48x16xf32>
    %17 = vector.extract_strided_slice %8 {offsets = [16, 0], sizes = [16, 16], strides = [1, 1]} : vector<32x16xf32> to vector<16x16xf32>
    %18 = vector.extract_strided_slice %10 {offsets = [16, 0], sizes = [16, 16], strides = [1, 1]} : vector<32x16xf32> to vector<16x16xf32>
    %19 = vector.extract_strided_slice %12 {offsets = [16, 0], sizes = [16, 16], strides = [1, 1]} : vector<32x16xf32> to vector<16x16xf32>
    %20 = tpu.concatenate %17, %18, %19 in 0 : vector<16x16xf32>, vector<16x16xf32>, vector<16x16xf32> -> vector<48x16xf32>
    %c0_8 = arith.constant 0 : index
    %c0_9 = arith.constant 0 : index
    %21 = vector.load %arg5[%c0_8, %c0_9] : memref<16x16xf32, #tpu.memory_space<vmem>>, vector<16x16xf32>
    %cst_10 = arith.constant dense<0.000000e+00> : vector<48x16xf32>
    %22 = tpu.matmul %16, %21, %cst_10 {dimension_numbers = #tpu.dot_dimension_numbers<[1], [0], [0], [1], [0, 0, 1, 1], [], []>} : vector<48x16xf32>, vector<16x16xf32>, vector<48x16xf32> -> vector<48x16xf32>
    %c0_11 = arith.constant 0 : index
    %c0_12 = arith.constant 0 : index
    %23 = vector.load %arg6[%c0_11, %c0_12] : memref<16x16xf32, #tpu.memory_space<vmem>>, vector<16x16xf32>
    %cst_13 = arith.constant dense<0.000000e+00> : vector<48x16xf32>
    %24 = tpu.matmul %20, %23, %cst_13 {dimension_numbers = #tpu.dot_dimension_numbers<[1], [0], [0], [1], [0, 0, 1, 1], [], []>} : vector<48x16xf32>, vector<16x16xf32>, vector<48x16xf32> -> vector<48x16xf32>
    %25 = arith.subf %22, %24 : vector<48x16xf32>
    %26 = vector.extract_strided_slice %25 {offsets = [0, 0], sizes = [16, 16], strides = [1, 1]} : vector<48x16xf32> to vector<16x16xf32>
    %27 = vector.extract_strided_slice %25 {offsets = [16, 0], sizes = [16, 16], strides = [1, 1]} : vector<48x16xf32> to vector<16x16xf32>
    %28 = vector.extract_strided_slice %25 {offsets = [32, 0], sizes = [16, 16], strides = [1, 1]} : vector<48x16xf32> to vector<16x16xf32>
    %29 = arith.mulf %27, %27 : vector<16x16xf32>
    %30 = arith.mulf %28, %28 : vector<16x16xf32>
    %31 = arith.addf %29, %30 : vector<16x16xf32>
    %32 = math.sqrt %31 : vector<16x16xf32>
    %cst_14 = arith.constant 9.99999997E-7 : f32
    %33 = vector.broadcast %cst_14 : f32 to vector<16x16xf32>
    %34 = arith.addf %32, %33 : vector<16x16xf32>
    %35 = math.atan2 %26, %34 : vector<16x16xf32>
    %36 = vector.shape_cast %35 : vector<16x16xf32> to vector<256xf32>
    %c0_15 = arith.constant 0 : index
    %c0_16 = arith.constant 0 : index
    %c0_17 = arith.constant 0 : index
    %c0_18 = arith.constant 0 : index
    %37 = vector.load %arg7[%c0_15, %c0_16, %c0_17, %c0_18] : memref<1x1x1x256xf32, #tpu.memory_space<vmem>>, vector<1x1x1x256xf32>
    %38 = vector.shape_cast %37 : vector<1x1x1x256xf32> to vector<256xf32>
    %39 = vector.shape_cast %36 : vector<256xf32> to vector<1x1x1x256xf32>
    tpu.vector_store %arg7[%c0_15, %c0_16, %c0_17, %c0_18], %39 {strides = array<i32>} : memref<1x1x1x256xf32, #tpu.memory_space<vmem>>, vector<1x1x1x256xf32>,
    return
  }
  func.func @transform_0(%arg0: i32, %arg1: i32) -> (i32, i32, i32) {
    %c0_i32 = arith.constant 0 : i32
    %c0_i32_0 = arith.constant 0 : i32
    %c0_i32_1 = arith.constant 0 : i32
    return %arg0, %c0_i32, %c0_i32_0 : i32, i32, i32
  }
  func.func @transform_1(%arg0: i32, %arg1: i32) -> (i32, i32, i32) {
    %c0_i32 = arith.constant 0 : i32
    %c0_i32_0 = arith.constant 0 : i32
    %c0_i32_1 = arith.constant 0 : i32
    %c0_i32_2 = arith.constant 0 : i32
    return %c0_i32, %c0_i32_0, %c0_i32_1 : i32, i32, i32
  }
  func.func @transform_2(%arg0: i32, %arg1: i32) -> (i32, i32) {
    %c0_i32 = arith.constant 0 : i32
    %c0_i32_0 = arith.constant 0 : i32
    %c0_i32_1 = arith.constant 0 : i32
    return %c0_i32, %c0_i32_0 : i32, i32
  }
  func.func @transform_3(%arg0: i32, %arg1: i32) -> (i32, i32) {
    %c0_i32 = arith.constant 0 : i32
    %c0_i32_0 = arith.constant 0 : i32
    %c0_i32_1 = arith.constant 0 : i32
    return %c0_i32, %c0_i32_0 : i32, i32
  }
  func.func @transform_4(%arg0: i32, %arg1: i32) -> (i32, i32) {
    %c0_i32 = arith.constant 0 : i32
    %c0_i32_0 = arith.constant 0 : i32
    %c0_i32_1 = arith.constant 0 : i32
    return %c0_i32, %c0_i32_0 : i32, i32
  }
  func.func @transform_5(%arg0: i32, %arg1: i32) -> (i32, i32, i32, i32) {
    %c0_i32 = arith.constant 0 : i32
    %c0_i32_0 = arith.constant 0 : i32
    %c0_i32_1 = arith.constant 0 : i32
    return %arg0, %arg1, %c0_i32, %c0_i32_0 : i32, i32, i32, i32
  }
}

module attributes {stable_mosaic.version = 11 : i64} {
  func.func @_monogenic_kernel(%arg0: i32, %arg1: i32, %arg2: memref<1x96x16xf32, #tpu.memory_space<vmem>>, %arg3: memref<3x96x16xf32, #tpu.memory_space<vmem>>, %arg4: memref<32x32xf32, #tpu.memory_space<vmem>>, %arg5: memref<16x16xf32, #tpu.memory_space<vmem>>, %arg6: memref<16x16xf32, #tpu.memory_space<vmem>>, %arg7: memref<1x1x1x256xf32, #tpu.memory_space<vmem>>) attributes {dimension_semantics = [#tpu.dimension_semantics<parallel>, #tpu.dimension_semantics<parallel>], iteration_bounds = array<i64: 2, 3>, scalar_prefetch = 0 : i64, scratch_operands = 0 : i64, tpu.core_type = #tpu.core_type<tc>, window_params = [{transform_indices = @transform_0, window_bounds = array<i64: 1, 96, 16>}, {pipeline_mode = #tpu.pipeline_mode<synchronous>, transform_indices = @transform_1, window_bounds = array<i64: 3, 96, 16>}, {pipeline_mode = #tpu.pipeline_mode<synchronous>, transform_indices = @transform_2, window_bounds = array<i64: 32, 32>}, {pipeline_mode = #tpu.pipeline_mode<synchronous>, transform_indices = @transform_3, window_bounds = array<i64: 16, 16>}, {pipeline_mode = #tpu.pipeline_mode<synchronous>, transform_indices = @transform_4, window_bounds = array<i64: 16, 16>}, {transform_indices = @transform_5, window_bounds = array<i64: 1, 1, 1, 256>}]} {
    %0 = arith.index_cast %arg1 : i32 to index
    %c0 = arith.constant 0 : index
    %c0_0 = arith.constant 0 : index
    %1 = vector.load %arg3[%0, %c0, %c0_0] : memref<3x96x16xf32, #tpu.memory_space<vmem>>, vector<1x96x16xf32>
    %2 = vector.shape_cast %1 : vector<1x96x16xf32> to vector<96x16xf32>
    %c0_1 = arith.constant 0 : index
    %c0_2 = arith.constant 0 : index
    %c0_3 = arith.constant 0 : index
    %3 = vector.load %arg2[%c0_1, %c0_2, %c0_3] : memref<1x96x16xf32, #tpu.memory_space<vmem>>, vector<1x96x16xf32>
    %4 = vector.shape_cast %3 : vector<1x96x16xf32> to vector<96x16xf32>
    %5 = arith.mulf %2, %4 : vector<96x16xf32>
    %c0_4 = arith.constant 0 : index
    %c0_5 = arith.constant 0 : index
    %6 = vector.load %arg4[%c0_4, %c0_5] : memref<32x32xf32, #tpu.memory_space<vmem>>, vector<32x32xf32>
    %7 = vector.extract_strided_slice %5 {offsets = [0, 0], sizes = [32, 16], strides = [1, 1]} : vector<96x16xf32> to vector<32x16xf32>
    %cst = arith.constant dense<0.000000e+00> : vector<32x16xf32>
    %8 = tpu.matmul %6, %7, %cst {dimension_numbers = #tpu.dot_dimension_numbers<[1], [0], [0], [1], [0, 0, 1, 1], [], []>} : vector<32x32xf32>, vector<32x16xf32>, vector<32x16xf32> -> vector<32x16xf32>
    %9 = vector.extract_strided_slice %5 {offsets = [32, 0], sizes = [32, 16], strides = [1, 1]} : vector<96x16xf32> to vector<32x16xf32>
    %cst_6 = arith.constant dense<0.000000e+00> : vector<32x16xf32>
    %10 = tpu.matmul %6, %9, %cst_6 {dimension_numbers = #tpu.dot_dimension_numbers<[1], [0], [0], [1], [0, 0, 1, 1], [], []>} : vector<32x32xf32>, vector<32x16xf32>, vector<32x16xf32> -> vector<32x16xf32>
    %11 = vector.extract_strided_slice %5 {offsets = [64, 0], sizes = [32, 16], strides = [1, 1]} : vector<96x16xf32> to vector<32x16xf32>
    %cst_7 = arith.constant dense<0.000000e+00> : vector<32x16xf32>
    %12 = tpu.matmul %6, %11, %cst_7 {dimension_numbers = #tpu.dot_dimension_numbers<[1], [0], [0], [1], [0, 0, 1, 1], [], []>} : vector<32x32xf32>, vector<32x16xf32>, vector<32x16xf32> -> vector<32x16xf32>
    %13 = vector.extract_strided_slice %8 {offsets = [0, 0], sizes = [16, 16], strides = [1, 1]} : vector<32x16xf32> to vector<16x16xf32>
    %14 = vector.extract_strided_slice %10 {offsets = [0, 0], sizes = [16, 16], strides = [1, 1]} : vector<32x16xf32> to vector<16x16xf32>
    %15 = vector.extract_strided_slice %12 {offsets = [0, 0], sizes = [16, 16], strides = [1, 1]} : vector<32x16xf32> to vector<16x16xf32>
    %16 = tpu.concatenate %13, %14, %15 in 0 : vector<16x16xf32>, vector<16x16xf32>, vector<16x16xf32> -> vector<48x16xf32>
    %17 = vector.extract_strided_slice %8 {offsets = [16, 0], sizes = [16, 16], strides = [1, 1]} : vector<32x16xf32> to vector<16x16xf32>
    %18 = vector.extract_strided_slice %10 {offsets = [16, 0], sizes = [16, 16], strides = [1, 1]} : vector<32x16xf32> to vector<16x16xf32>
    %19 = vector.extract_strided_slice %12 {offsets = [16, 0], sizes = [16, 16], strides = [1, 1]} : vector<32x16xf32> to vector<16x16xf32>
    %20 = tpu.concatenate %17, %18, %19 in 0 : vector<16x16xf32>, vector<16x16xf32>, vector<16x16xf32> -> vector<48x16xf32>
    %c0_8 = arith.constant 0 : index
    %c0_9 = arith.constant 0 : index
    %21 = vector.load %arg5[%c0_8, %c0_9] : memref<16x16xf32, #tpu.memory_space<vmem>>, vector<16x16xf32>
    %cst_10 = arith.constant dense<0.000000e+00> : vector<48x16xf32>
    %22 = tpu.matmul %16, %21, %cst_10 {dimension_numbers = #tpu.dot_dimension_numbers<[1], [0], [0], [1], [0, 0, 1, 1], [], []>} : vector<48x16xf32>, vector<16x16xf32>, vector<48x16xf32> -> vector<48x16xf32>
    %c0_11 = arith.constant 0 : index
    %c0_12 = arith.constant 0 : index
    %23 = vector.load %arg6[%c0_11, %c0_12] : memref<16x16xf32, #tpu.memory_space<vmem>>, vector<16x16xf32>
    %cst_13 = arith.constant dense<0.000000e+00> : vector<48x16xf32>
    %24 = tpu.matmul %20, %23, %cst_13 {dimension_numbers = #tpu.dot_dimension_numbers<[1], [0], [0], [1], [0, 0, 1, 1], [], []>} : vector<48x16xf32>, vector<16x16xf32>, vector<48x16xf32> -> vector<48x16xf32>
    %25 = arith.subf %22, %24 : vector<48x16xf32>
    %26 = vector.extract_strided_slice %25 {offsets = [0, 0], sizes = [16, 16], strides = [1, 1]} : vector<48x16xf32> to vector<16x16xf32>
    %27 = vector.extract_strided_slice %25 {offsets = [16, 0], sizes = [16, 16], strides = [1, 1]} : vector<48x16xf32> to vector<16x16xf32>
    %28 = vector.extract_strided_slice %25 {offsets = [32, 0], sizes = [16, 16], strides = [1, 1]} : vector<48x16xf32> to vector<16x16xf32>
    %29 = arith.mulf %27, %27 : vector<16x16xf32>
    %30 = arith.mulf %28, %28 : vector<16x16xf32>
    %31 = arith.addf %29, %30 : vector<16x16xf32>
    %32 = math.sqrt %31 : vector<16x16xf32>
    %cst_14 = arith.constant 9.99999997E-7 : f32
    %33 = vector.broadcast %cst_14 : f32 to vector<16x16xf32>
    %34 = arith.addf %32, %33 : vector<16x16xf32>
    %35 = math.atan2 %26, %34 : vector<16x16xf32>
    %36 = vector.shape_cast %35 : vector<16x16xf32> to vector<256xf32>
    %c0_15 = arith.constant 0 : index
    %c0_16 = arith.constant 0 : index
    %c0_17 = arith.constant 0 : index
    %c0_18 = arith.constant 0 : index
    %37 = vector.load %arg7[%c0_15, %c0_16, %c0_17, %c0_18] : memref<1x1x1x256xf32, #tpu.memory_space<vmem>>, vector<1x1x1x256xf32>
    %38 = vector.shape_cast %37 : vector<1x1x1x256xf32> to vector<256xf32>
    %39 = vector.shape_cast %36 : vector<256xf32> to vector<1x1x1x256xf32>
    tpu.vector_store %arg7[%c0_15, %c0_16, %c0_17, %c0_18], %39 {strides = array<i32>} : memref<1x1x1x256xf32, #tpu.memory_space<vmem>>, vector<1x1x1x256xf32>,
    return
  }
  func.func @transform_0(%arg0: i32, %arg1: i32) -> (i32, i32, i32) {
    %c0_i32 = arith.constant 0 : i32
    %c0_i32_0 = arith.constant 0 : i32
    %c0_i32_1 = arith.constant 0 : i32
    return %arg0, %c0_i32, %c0_i32_0 : i32, i32, i32
  }
  func.func @transform_1(%arg0: i32, %arg1: i32) -> (i32, i32, i32) {
    %c0_i32 = arith.constant 0 : i32
    %c0_i32_0 = arith.constant 0 : i32
    %c0_i32_1 = arith.constant 0 : i32
    %c0_i32_2 = arith.constant 0 : i32
    return %c0_i32, %c0_i32_0, %c0_i32_1 : i32, i32, i32
  }
  func.func @transform_2(%arg0: i32, %arg1: i32) -> (i32, i32) {
    %c0_i32 = arith.constant 0 : i32
    %c0_i32_0 = arith.constant 0 : i32
    %c0_i32_1 = arith.constant 0 : i32
    return %c0_i32, %c0_i32_0 : i32, i32
  }
  func.func @transform_3(%arg0: i32, %arg1: i32) -> (i32, i32) {
    %c0_i32 = arith.constant 0 : i32
    %c0_i32_0 = arith.constant 0 : i32
    %c0_i32_1 = arith.constant 0 : i32
    return %c0_i32, %c0_i32_0 : i32, i32
  }
  func.func @transform_4(%arg0: i32, %arg1: i32) -> (i32, i32) {
    %c0_i32 = arith.constant 0 : i32
    %c0_i32_0 = arith.constant 0 : i32
    %c0_i32_1 = arith.constant 0 : i32
    return %c0_i32, %c0_i32_0 : i32, i32
  }
  func.func @transform_5(%arg0: i32, %arg1: i32) -> (i32, i32, i32, i32) {
    %c0_i32 = arith.constant 0 : i32
    %c0_i32_0 = arith.constant 0 : i32
    %c0_i32_1 = arith.constant 0 : i32
    return %arg0, %arg1, %c0_i32, %c0_i32_0 : i32, i32, i32, i32
  }
}

module attributes {stable_mosaic.version = 11 : i64} {
  func.func @_monogenic_kernel(%arg0: i32, %arg1: i32, %arg2: memref<1x96x16xf32, #tpu.memory_space<vmem>>, %arg3: memref<3x96x16xf32, #tpu.memory_space<vmem>>, %arg4: memref<32x32xf32, #tpu.memory_space<vmem>>, %arg5: memref<16x16xf32, #tpu.memory_space<vmem>>, %arg6: memref<16x16xf32, #tpu.memory_space<vmem>>, %arg7: memref<1x1x16x16xf32, #tpu.memory_space<vmem>>) attributes {dimension_semantics = [#tpu.dimension_semantics<parallel>, #tpu.dimension_semantics<parallel>], iteration_bounds = array<i64: 2, 3>, scalar_prefetch = 0 : i64, scratch_operands = 0 : i64, tpu.core_type = #tpu.core_type<tc>, window_params = [{transform_indices = @transform_0, window_bounds = array<i64: 1, 96, 16>}, {pipeline_mode = #tpu.pipeline_mode<synchronous>, transform_indices = @transform_1, window_bounds = array<i64: 3, 96, 16>}, {pipeline_mode = #tpu.pipeline_mode<synchronous>, transform_indices = @transform_2, window_bounds = array<i64: 32, 32>}, {pipeline_mode = #tpu.pipeline_mode<synchronous>, transform_indices = @transform_3, window_bounds = array<i64: 16, 16>}, {pipeline_mode = #tpu.pipeline_mode<synchronous>, transform_indices = @transform_4, window_bounds = array<i64: 16, 16>}, {transform_indices = @transform_5, window_bounds = array<i64: 1, 1, 16, 16>}]} {
    %0 = arith.index_cast %arg1 : i32 to index
    %c0 = arith.constant 0 : index
    %c0_0 = arith.constant 0 : index
    %1 = vector.load %arg3[%0, %c0, %c0_0] : memref<3x96x16xf32, #tpu.memory_space<vmem>>, vector<1x96x16xf32>
    %2 = vector.shape_cast %1 : vector<1x96x16xf32> to vector<96x16xf32>
    %c0_1 = arith.constant 0 : index
    %c0_2 = arith.constant 0 : index
    %c0_3 = arith.constant 0 : index
    %3 = vector.load %arg2[%c0_1, %c0_2, %c0_3] : memref<1x96x16xf32, #tpu.memory_space<vmem>>, vector<1x96x16xf32>
    %4 = vector.shape_cast %3 : vector<1x96x16xf32> to vector<96x16xf32>
    %5 = arith.mulf %2, %4 : vector<96x16xf32>
    %c0_4 = arith.constant 0 : index
    %c0_5 = arith.constant 0 : index
    %6 = vector.load %arg4[%c0_4, %c0_5] : memref<32x32xf32, #tpu.memory_space<vmem>>, vector<32x32xf32>
    %7 = vector.extract_strided_slice %5 {offsets = [0, 0], sizes = [32, 16], strides = [1, 1]} : vector<96x16xf32> to vector<32x16xf32>
    %cst = arith.constant dense<0.000000e+00> : vector<32x16xf32>
    %8 = tpu.matmul %6, %7, %cst {dimension_numbers = #tpu.dot_dimension_numbers<[1], [0], [0], [1], [0, 0, 1, 1], [], []>} : vector<32x32xf32>, vector<32x16xf32>, vector<32x16xf32> -> vector<32x16xf32>
    %9 = vector.extract_strided_slice %5 {offsets = [32, 0], sizes = [32, 16], strides = [1, 1]} : vector<96x16xf32> to vector<32x16xf32>
    %cst_6 = arith.constant dense<0.000000e+00> : vector<32x16xf32>
    %10 = tpu.matmul %6, %9, %cst_6 {dimension_numbers = #tpu.dot_dimension_numbers<[1], [0], [0], [1], [0, 0, 1, 1], [], []>} : vector<32x32xf32>, vector<32x16xf32>, vector<32x16xf32> -> vector<32x16xf32>
    %11 = vector.extract_strided_slice %5 {offsets = [64, 0], sizes = [32, 16], strides = [1, 1]} : vector<96x16xf32> to vector<32x16xf32>
    %cst_7 = arith.constant dense<0.000000e+00> : vector<32x16xf32>
    %12 = tpu.matmul %6, %11, %cst_7 {dimension_numbers = #tpu.dot_dimension_numbers<[1], [0], [0], [1], [0, 0, 1, 1], [], []>} : vector<32x32xf32>, vector<32x16xf32>, vector<32x16xf32> -> vector<32x16xf32>
    %13 = vector.extract_strided_slice %8 {offsets = [0, 0], sizes = [16, 16], strides = [1, 1]} : vector<32x16xf32> to vector<16x16xf32>
    %14 = vector.extract_strided_slice %10 {offsets = [0, 0], sizes = [16, 16], strides = [1, 1]} : vector<32x16xf32> to vector<16x16xf32>
    %15 = vector.extract_strided_slice %12 {offsets = [0, 0], sizes = [16, 16], strides = [1, 1]} : vector<32x16xf32> to vector<16x16xf32>
    %16 = tpu.concatenate %13, %14, %15 in 0 : vector<16x16xf32>, vector<16x16xf32>, vector<16x16xf32> -> vector<48x16xf32>
    %17 = vector.extract_strided_slice %8 {offsets = [16, 0], sizes = [16, 16], strides = [1, 1]} : vector<32x16xf32> to vector<16x16xf32>
    %18 = vector.extract_strided_slice %10 {offsets = [16, 0], sizes = [16, 16], strides = [1, 1]} : vector<32x16xf32> to vector<16x16xf32>
    %19 = vector.extract_strided_slice %12 {offsets = [16, 0], sizes = [16, 16], strides = [1, 1]} : vector<32x16xf32> to vector<16x16xf32>
    %20 = tpu.concatenate %17, %18, %19 in 0 : vector<16x16xf32>, vector<16x16xf32>, vector<16x16xf32> -> vector<48x16xf32>
    %c0_8 = arith.constant 0 : index
    %c0_9 = arith.constant 0 : index
    %21 = vector.load %arg5[%c0_8, %c0_9] : memref<16x16xf32, #tpu.memory_space<vmem>>, vector<16x16xf32>
    %cst_10 = arith.constant dense<0.000000e+00> : vector<48x16xf32>
    %22 = tpu.matmul %16, %21, %cst_10 {dimension_numbers = #tpu.dot_dimension_numbers<[1], [0], [0], [1], [0, 0, 1, 1], [], []>} : vector<48x16xf32>, vector<16x16xf32>, vector<48x16xf32> -> vector<48x16xf32>
    %c0_11 = arith.constant 0 : index
    %c0_12 = arith.constant 0 : index
    %23 = vector.load %arg6[%c0_11, %c0_12] : memref<16x16xf32, #tpu.memory_space<vmem>>, vector<16x16xf32>
    %cst_13 = arith.constant dense<0.000000e+00> : vector<48x16xf32>
    %24 = tpu.matmul %20, %23, %cst_13 {dimension_numbers = #tpu.dot_dimension_numbers<[1], [0], [0], [1], [0, 0, 1, 1], [], []>} : vector<48x16xf32>, vector<16x16xf32>, vector<48x16xf32> -> vector<48x16xf32>
    %25 = arith.subf %22, %24 : vector<48x16xf32>
    %26 = vector.extract_strided_slice %25 {offsets = [0, 0], sizes = [16, 16], strides = [1, 1]} : vector<48x16xf32> to vector<16x16xf32>
    %27 = vector.extract_strided_slice %25 {offsets = [16, 0], sizes = [16, 16], strides = [1, 1]} : vector<48x16xf32> to vector<16x16xf32>
    %28 = vector.extract_strided_slice %25 {offsets = [32, 0], sizes = [16, 16], strides = [1, 1]} : vector<48x16xf32> to vector<16x16xf32>
    %29 = arith.mulf %27, %27 : vector<16x16xf32>
    %30 = arith.mulf %28, %28 : vector<16x16xf32>
    %31 = arith.addf %29, %30 : vector<16x16xf32>
    %32 = math.sqrt %31 : vector<16x16xf32>
    %cst_14 = arith.constant 9.99999997E-7 : f32
    %33 = vector.broadcast %cst_14 : f32 to vector<16x16xf32>
    %34 = arith.addf %32, %33 : vector<16x16xf32>
    %35 = math.atan2 %26, %34 : vector<16x16xf32>
    %c0_15 = arith.constant 0 : index
    %c0_16 = arith.constant 0 : index
    %c0_17 = arith.constant 0 : index
    %c0_18 = arith.constant 0 : index
    %36 = vector.load %arg7[%c0_15, %c0_16, %c0_17, %c0_18] : memref<1x1x16x16xf32, #tpu.memory_space<vmem>>, vector<1x1x16x16xf32>
    %37 = vector.shape_cast %36 : vector<1x1x16x16xf32> to vector<16x16xf32>
    %38 = vector.shape_cast %35 : vector<16x16xf32> to vector<1x1x16x16xf32>
    tpu.vector_store %arg7[%c0_15, %c0_16, %c0_17, %c0_18], %38 {strides = array<i32>} : memref<1x1x16x16xf32, #tpu.memory_space<vmem>>, vector<1x1x16x16xf32>,
    return
  }
  func.func @transform_0(%arg0: i32, %arg1: i32) -> (i32, i32, i32) {
    %c0_i32 = arith.constant 0 : i32
    %c0_i32_0 = arith.constant 0 : i32
    %c0_i32_1 = arith.constant 0 : i32
    return %arg0, %c0_i32, %c0_i32_0 : i32, i32, i32
  }
  func.func @transform_1(%arg0: i32, %arg1: i32) -> (i32, i32, i32) {
    %c0_i32 = arith.constant 0 : i32
    %c0_i32_0 = arith.constant 0 : i32
    %c0_i32_1 = arith.constant 0 : i32
    %c0_i32_2 = arith.constant 0 : i32
    return %c0_i32, %c0_i32_0, %c0_i32_1 : i32, i32, i32
  }
  func.func @transform_2(%arg0: i32, %arg1: i32) -> (i32, i32) {
    %c0_i32 = arith.constant 0 : i32
    %c0_i32_0 = arith.constant 0 : i32
    %c0_i32_1 = arith.constant 0 : i32
    return %c0_i32, %c0_i32_0 : i32, i32
  }
  func.func @transform_3(%arg0: i32, %arg1: i32) -> (i32, i32) {
    %c0_i32 = arith.constant 0 : i32
    %c0_i32_0 = arith.constant 0 : i32
    %c0_i32_1 = arith.constant 0 : i32
    return %c0_i32, %c0_i32_0 : i32, i32
  }
  func.func @transform_4(%arg0: i32, %arg1: i32) -> (i32, i32) {
    %c0_i32 = arith.constant 0 : i32
    %c0_i32_0 = arith.constant 0 : i32
    %c0_i32_1 = arith.constant 0 : i32
    return %c0_i32, %c0_i32_0 : i32, i32
  }
  func.func @transform_5(%arg0: i32, %arg1: i32) -> (i32, i32, i32, i32) {
    %c0_i32 = arith.constant 0 : i32
    %c0_i32_0 = arith.constant 0 : i32
    %c0_i32_1 = arith.constant 0 : i32
    return %arg0, %arg1, %c0_i32, %c0_i32_0 : i32, i32, i32, i32
  }
}

module attributes {stable_mosaic.version = 11 : i64} {
  func.func @_monogenic_kernel(%arg0: i32, %arg1: i32, %arg2: memref<1x96x16xf32, #tpu.memory_space<vmem>>, %arg3: memref<3x96x16xf32, #tpu.memory_space<vmem>>, %arg4: memref<32x32xf32, #tpu.memory_space<vmem>>, %arg5: memref<16x16xf32, #tpu.memory_space<vmem>>, %arg6: memref<16x16xf32, #tpu.memory_space<vmem>>, %arg7: memref<1x1x16x16xf32, #tpu.memory_space<vmem>>) attributes {dimension_semantics = [#tpu.dimension_semantics<parallel>, #tpu.dimension_semantics<parallel>], iteration_bounds = array<i64: 2, 3>, scalar_prefetch = 0 : i64, scratch_operands = 0 : i64, tpu.core_type = #tpu.core_type<tc>, window_params = [{transform_indices = @transform_0, window_bounds = array<i64: 1, 96, 16>}, {pipeline_mode = #tpu.pipeline_mode<synchronous>, transform_indices = @transform_1, window_bounds = array<i64: 3, 96, 16>}, {pipeline_mode = #tpu.pipeline_mode<synchronous>, transform_indices = @transform_2, window_bounds = array<i64: 32, 32>}, {pipeline_mode = #tpu.pipeline_mode<synchronous>, transform_indices = @transform_3, window_bounds = array<i64: 16, 16>}, {pipeline_mode = #tpu.pipeline_mode<synchronous>, transform_indices = @transform_4, window_bounds = array<i64: 16, 16>}, {transform_indices = @transform_5, window_bounds = array<i64: 1, 1, 16, 16>}]} {
    %0 = arith.index_cast %arg1 : i32 to index
    %c0 = arith.constant 0 : index
    %c0_0 = arith.constant 0 : index
    %1 = vector.load %arg3[%0, %c0, %c0_0] : memref<3x96x16xf32, #tpu.memory_space<vmem>>, vector<1x96x16xf32>
    %2 = vector.shape_cast %1 : vector<1x96x16xf32> to vector<96x16xf32>
    %c0_1 = arith.constant 0 : index
    %c0_2 = arith.constant 0 : index
    %c0_3 = arith.constant 0 : index
    %3 = vector.load %arg2[%c0_1, %c0_2, %c0_3] : memref<1x96x16xf32, #tpu.memory_space<vmem>>, vector<1x96x16xf32>
    %4 = vector.shape_cast %3 : vector<1x96x16xf32> to vector<96x16xf32>
    %5 = arith.mulf %2, %4 : vector<96x16xf32>
    %c0_4 = arith.constant 0 : index
    %c0_5 = arith.constant 0 : index
    %6 = vector.load %arg4[%c0_4, %c0_5] : memref<32x32xf32, #tpu.memory_space<vmem>>, vector<32x32xf32>
    %7 = vector.extract_strided_slice %5 {offsets = [0, 0], sizes = [32, 16], strides = [1, 1]} : vector<96x16xf32> to vector<32x16xf32>
    %cst = arith.constant dense<0.000000e+00> : vector<32x16xf32>
    %8 = tpu.matmul %6, %7, %cst {dimension_numbers = #tpu.dot_dimension_numbers<[1], [0], [0], [1], [0, 0, 1, 1], [], []>} : vector<32x32xf32>, vector<32x16xf32>, vector<32x16xf32> -> vector<32x16xf32>
    %9 = vector.extract_strided_slice %5 {offsets = [32, 0], sizes = [32, 16], strides = [1, 1]} : vector<96x16xf32> to vector<32x16xf32>
    %cst_6 = arith.constant dense<0.000000e+00> : vector<32x16xf32>
    %10 = tpu.matmul %6, %9, %cst_6 {dimension_numbers = #tpu.dot_dimension_numbers<[1], [0], [0], [1], [0, 0, 1, 1], [], []>} : vector<32x32xf32>, vector<32x16xf32>, vector<32x16xf32> -> vector<32x16xf32>
    %11 = vector.extract_strided_slice %5 {offsets = [64, 0], sizes = [32, 16], strides = [1, 1]} : vector<96x16xf32> to vector<32x16xf32>
    %cst_7 = arith.constant dense<0.000000e+00> : vector<32x16xf32>
    %12 = tpu.matmul %6, %11, %cst_7 {dimension_numbers = #tpu.dot_dimension_numbers<[1], [0], [0], [1], [0, 0, 1, 1], [], []>} : vector<32x32xf32>, vector<32x16xf32>, vector<32x16xf32> -> vector<32x16xf32>
    %13 = vector.extract_strided_slice %8 {offsets = [0, 0], sizes = [16, 16], strides = [1, 1]} : vector<32x16xf32> to vector<16x16xf32>
    %14 = vector.extract_strided_slice %10 {offsets = [0, 0], sizes = [16, 16], strides = [1, 1]} : vector<32x16xf32> to vector<16x16xf32>
    %15 = vector.extract_strided_slice %12 {offsets = [0, 0], sizes = [16, 16], strides = [1, 1]} : vector<32x16xf32> to vector<16x16xf32>
    %16 = tpu.concatenate %13, %14, %15 in 0 : vector<16x16xf32>, vector<16x16xf32>, vector<16x16xf32> -> vector<48x16xf32>
    %17 = vector.extract_strided_slice %8 {offsets = [16, 0], sizes = [16, 16], strides = [1, 1]} : vector<32x16xf32> to vector<16x16xf32>
    %18 = vector.extract_strided_slice %10 {offsets = [16, 0], sizes = [16, 16], strides = [1, 1]} : vector<32x16xf32> to vector<16x16xf32>
    %19 = vector.extract_strided_slice %12 {offsets = [16, 0], sizes = [16, 16], strides = [1, 1]} : vector<32x16xf32> to vector<16x16xf32>
    %20 = tpu.concatenate %17, %18, %19 in 0 : vector<16x16xf32>, vector<16x16xf32>, vector<16x16xf32> -> vector<48x16xf32>
    %c0_8 = arith.constant 0 : index
    %c0_9 = arith.constant 0 : index
    %21 = vector.load %arg5[%c0_8, %c0_9] : memref<16x16xf32, #tpu.memory_space<vmem>>, vector<16x16xf32>
    %cst_10 = arith.constant dense<0.000000e+00> : vector<48x16xf32>
    %22 = tpu.matmul %16, %21, %cst_10 {dimension_numbers = #tpu.dot_dimension_numbers<[1], [0], [0], [1], [0, 0, 1, 1], [], []>} : vector<48x16xf32>, vector<16x16xf32>, vector<48x16xf32> -> vector<48x16xf32>
    %c0_11 = arith.constant 0 : index
    %c0_12 = arith.constant 0 : index
    %23 = vector.load %arg6[%c0_11, %c0_12] : memref<16x16xf32, #tpu.memory_space<vmem>>, vector<16x16xf32>
    %cst_13 = arith.constant dense<0.000000e+00> : vector<48x16xf32>
    %24 = tpu.matmul %20, %23, %cst_13 {dimension_numbers = #tpu.dot_dimension_numbers<[1], [0], [0], [1], [0, 0, 1, 1], [], []>} : vector<48x16xf32>, vector<16x16xf32>, vector<48x16xf32> -> vector<48x16xf32>
    %25 = arith.subf %22, %24 : vector<48x16xf32>
    %26 = vector.extract_strided_slice %25 {offsets = [0, 0], sizes = [16, 16], strides = [1, 1]} : vector<48x16xf32> to vector<16x16xf32>
    %27 = vector.extract_strided_slice %25 {offsets = [16, 0], sizes = [16, 16], strides = [1, 1]} : vector<48x16xf32> to vector<16x16xf32>
    %28 = vector.extract_strided_slice %25 {offsets = [32, 0], sizes = [16, 16], strides = [1, 1]} : vector<48x16xf32> to vector<16x16xf32>
    %29 = arith.mulf %27, %27 : vector<16x16xf32>
    %30 = arith.mulf %28, %28 : vector<16x16xf32>
    %31 = arith.addf %29, %30 : vector<16x16xf32>
    %32 = math.sqrt %31 : vector<16x16xf32>
    %cst_14 = arith.constant 9.99999997E-7 : f32
    %33 = vector.broadcast %cst_14 : f32 to vector<16x16xf32>
    %34 = arith.addf %32, %33 : vector<16x16xf32>
    %35 = math.atan2 %26, %34 : vector<16x16xf32>
    %c0_15 = arith.constant 0 : index
    %c0_16 = arith.constant 0 : index
    %c0_17 = arith.constant 0 : index
    %c0_18 = arith.constant 0 : index
    %36 = vector.load %arg7[%c0_15, %c0_16, %c0_17, %c0_18] : memref<1x1x16x16xf32, #tpu.memory_space<vmem>>, vector<1x1x16x16xf32>
    %37 = vector.shape_cast %36 : vector<1x1x16x16xf32> to vector<16x16xf32>
    %38 = vector.shape_cast %35 : vector<16x16xf32> to vector<1x1x16x16xf32>
    tpu.vector_store %arg7[%c0_15, %c0_16, %c0_17, %c0_18], %38 {strides = array<i32>} : memref<1x1x16x16xf32, #tpu.memory_space<vmem>>, vector<1x1x16x16xf32>,
    return
  }
  func.func @transform_0(%arg0: i32, %arg1: i32) -> (i32, i32, i32) {
    %c0_i32 = arith.constant 0 : i32
    %c0_i32_0 = arith.constant 0 : i32
    %c0_i32_1 = arith.constant 0 : i32
    return %arg0, %c0_i32, %c0_i32_0 : i32, i32, i32
  }
  func.func @transform_1(%arg0: i32, %arg1: i32) -> (i32, i32, i32) {
    %c0_i32 = arith.constant 0 : i32
    %c0_i32_0 = arith.constant 0 : i32
    %c0_i32_1 = arith.constant 0 : i32
    %c0_i32_2 = arith.constant 0 : i32
    return %c0_i32, %c0_i32_0, %c0_i32_1 : i32, i32, i32
  }
  func.func @transform_2(%arg0: i32, %arg1: i32) -> (i32, i32) {
    %c0_i32 = arith.constant 0 : i32
    %c0_i32_0 = arith.constant 0 : i32
    %c0_i32_1 = arith.constant 0 : i32
    return %c0_i32, %c0_i32_0 : i32, i32
  }
  func.func @transform_3(%arg0: i32, %arg1: i32) -> (i32, i32) {
    %c0_i32 = arith.constant 0 : i32
    %c0_i32_0 = arith.constant 0 : i32
    %c0_i32_1 = arith.constant 0 : i32
    return %c0_i32, %c0_i32_0 : i32, i32
  }
  func.func @transform_4(%arg0: i32, %arg1: i32) -> (i32, i32) {
    %c0_i32 = arith.constant 0 : i32
    %c0_i32_0 = arith.constant 0 : i32
    %c0_i32_1 = arith.constant 0 : i32
    return %c0_i32, %c0_i32_0 : i32, i32
  }
  func.func @transform_5(%arg0: i32, %arg1: i32) -> (i32, i32, i32, i32) {
    %c0_i32 = arith.constant 0 : i32
    %c0_i32_0 = arith.constant 0 : i32
    %c0_i32_1 = arith.constant 0 : i32
    return %arg0, %arg1, %c0_i32, %c0_i32_0 : i32, i32, i32, i32
  }
}

</mosaic_0001>

<llo_original>
// kernel: tpu_custom_call.1
$region0: #{tpu_custom_call.1}
  #allocation0 [shape = 'u32[]', space=smem, size = 0x4, offset = 0x4, fixed_abs, tag = 'smem constant byte address 0x4 - core index']
  #allocation1 [shape = 'u32[144,128]{1,0:T(1,128)}', space=vmem, size = 0x12000, scoped, tag = 'internal scratch']
  %s0 = inlined_call_operand.vmem [shape: f32[2,96,16], index: 0, kind: input, shape index: {}]
  %s1 = inlined_call_operand.vmem [shape: f32[3,96,16], index: 1, kind: input, shape index: {}]
  %s2 = inlined_call_operand.vmem [shape: f32[32,32], index: 2, kind: input, shape index: {}]
  %s3 = inlined_call_operand.vmem [shape: f32[16,16], index: 3, kind: input, shape index: {}]
  %s4 = inlined_call_operand.vmem [shape: f32[16,16], index: 4, kind: input, shape index: {}]
  %s5 = inlined_call_operand.hbm [shape: f32[2,3,16,16], index: 5, kind: output, shape index: {}]
  %s6 = sld [smem:[#allocation0]]
  $region53: #{tpu_custom_call.1} parent=0
    _
  %s8 = ssub.s32 1, %s6
  %s9 = scalar_select 0, %s8, %s6
  $region1: #{tpu_custom_call.1} parent=0
    #allocation2 [shape = 'u8[16384]{0}', space=vmem, size = 0x4000, scoped, tag = 'output window, operand 0']
    #allocation3 [shape = 's32[2]{0}', space=sflag, size = 0x8, scoped, tag = 'scoped memory for tpu_custom_call.1']
    %10 = vsyncpa [#allocation3], 0
    %s11 = scalar_lea.sflag [#allocation3], 1
    %12 = vsyncpa %s11, 0
    loop: start=0, step=1, limit=8
    $region2: #{tpu_custom_call.1} parent=1 // loop_pre_header
      _
    $region3: #{tpu_custom_call.1} parent=1 // loop_header
      %s14 = sphi 0, %s18
      %p15 = scmp.ge.s32.totalorder %s14, 8
      %s21 = sphi 0, %s33
      %s22 = sphi 0, %s29
      %s23 = sphi 0, %s21
      %s24 = sphi 0, %s22
      %s25 = sphi 0, %s23
      %s26 = sphi 0, %s24
      %s36 = sphi 0, %s38
      %s39 = sphi 0, %s36
      %s40 = sphi 0, %s39
      %s56 = sphi 0, %s40
      %s60 = sphi 0, %s60
      %s62 = sphi 0, %s60
      %s63 = sphi 0, %s62
      %s77 = sphi 0, %s63
      %s81 = sphi 0, %s81
      %s83 = sphi 0, %s81
      %s84 = sphi 0, %s83
      %s98 = sphi 0, %s84
      %s102 = sphi 0, %s102
      %s104 = sphi 0, %s102
      %s105 = sphi 0, %s104
      %s119 = sphi 0, %s105
      %s123 = sphi 0, %s123
      %s125 = sphi 0, %s123
      %s126 = sphi 0, %s125
      %s140 = sphi 0, %s126
      %s148 = sphi 0, %s150
      %s151 = sphi 0, %s148
      %s152 = sphi 0, %s151
      %s168 = sphi 0, %s152
    $region4: #{tpu_custom_call.1} parent=1 // loop_header_branch
      %17 = sbr.rel (%p15) target = $region8
    $region5: #{tpu_custom_call.1} parent=1 // loop_body
      %s19 = ssub.s32 %s14, 1
      %s20 = ssub.s32 %s14, 2
      %s27 = sadd.s32 1, %s22
      %p28 = scmp.ge.s32.totalorder %s27, 3
      %s29 = scalar_select %p28, 0, %s27
      %s30 = sadd.s32 1, %s21
      %s31 = scalar_select %p28, %s30, %s21
      %p32 = scmp.ge.s32.totalorder %s31, 2
      %s33 = scalar_select %p32, 0, %s31
      %s34 = ssub.s32 %s21, %s33
      %p35 = scmp.eq.s32.totalorder %s34, 0
      %s37 = sadd.s32 %s36, 1
      %s38 = scalar_select %p35, %s36, %s37
      %p41 = pneg %p35
      %p42 = scmp.eq.s32.totalorder %s14, 5
      %p43 = por %p41, %p42
      %p44 = scmp.ne.s32.totalorder %s36, %s39
      %p45 = scmp.eq.s32.totalorder %s14, 0
      %p46 = por %p44, %p45
      %p47 = scmp.ne.s32.totalorder %s36, %s39
      %p48 = scmp.eq.s32.totalorder %s19, 5
      %p49 = por %p47, %p48
      %p50 = scmp.ne.s32.totalorder %s39, %s40
      %p51 = scmp.eq.s32.totalorder %s19, 0
      %p52 = por %p50, %p51
      %p53 = scmp.ne.s32.totalorder %s39, %s40
      %p54 = scmp.eq.s32.totalorder %s20, 5
      %p55 = por %p53, %p54
      %p57 = scmp.ne.s32.totalorder %s40, %s56
      %p58 = scmp.eq.s32.totalorder %s20, 0
      %p59 = por %p57, %p58
      %s61 = sadd.s32 %s60, 1
      %p64 = scmp.eq.s32.totalorder %s14, 5
      %p65 = scmp.ne.s32.totalorder %s60, %s62
      %p66 = scmp.eq.s32.totalorder %s14, 0
      %p67 = por %p65, %p66
      %p68 = scmp.ne.s32.totalorder %s60, %s62
      %p69 = scmp.eq.s32.totalorder %s19, 5
      %p70 = por %p68, %p69
      %p71 = scmp.ne.s32.totalorder %s62, %s63
      %p72 = scmp.eq.s32.totalorder %s19, 0
      %p73 = por %p71, %p72
      %p74 = scmp.ne.s32.totalorder %s62, %s63
      %p75 = scmp.eq.s32.totalorder %s20, 5
      %p76 = por %p74, %p75
      %p78 = scmp.ne.s32.totalorder %s63, %s77
      %p79 = scmp.eq.s32.totalorder %s20, 0
      %p80 = por %p78, %p79
      %s82 = sadd.s32 %s81, 1
      %p85 = scmp.eq.s32.totalorder %s14, 5
      %p86 = scmp.ne.s32.totalorder %s81, %s83
      %p87 = scmp.eq.s32.totalorder %s14, 0
      %p88 = por %p86, %p87
      %p89 = scmp.ne.s32.totalorder %s81, %s83
      %p90 = scmp.eq.s32.totalorder %s19, 5
      %p91 = por %p89, %p90
      %p92 = scmp.ne.s32.totalorder %s83, %s84
      %p93 = scmp.eq.s32.totalorder %s19, 0
      %p94 = por %p92, %p93
      %p95 = scmp.ne.s32.totalorder %s83, %s84
      %p96 = scmp.eq.s32.totalorder %s20, 5
      %p97 = por %p95, %p96
      %p99 = scmp.ne.s32.totalorder %s84, %s98
      %p100 = scmp.eq.s32.totalorder %s20, 0
      %p101 = por %p99, %p100
      %s103 = sadd.s32 %s102, 1
      %p106 = scmp.eq.s32.totalorder %s14, 5
      %p107 = scmp.ne.s32.totalorder %s102, %s104
      %p108 = scmp.eq.s32.totalorder %s14, 0
      %p109 = por %p107, %p108
      %p110 = scmp.ne.s32.totalorder %s102, %s104
      %p111 = scmp.eq.s32.totalorder %s19, 5
      %p112 = por %p110, %p111
      %p113 = scmp.ne.s32.totalorder %s104, %s105
      %p114 = scmp.eq.s32.totalorder %s19, 0
      %p115 = por %p113, %p114
      %p116 = scmp.ne.s32.totalorder %s104, %s105
      %p117 = scmp.eq.s32.totalorder %s20, 5
      %p118 = por %p116, %p117
      %p120 = scmp.ne.s32.totalorder %s105, %s119
      %p121 = scmp.eq.s32.totalorder %s20, 0
      %p122 = por %p120, %p121
      %s124 = sadd.s32 %s123, 1
      %p127 = scmp.eq.s32.totalorder %s14, 5
      %p128 = scmp.ne.s32.totalorder %s123, %s125
      %p129 = scmp.eq.s32.totalorder %s14, 0
      %p130 = por %p128, %p129
      %p131 = scmp.ne.s32.totalorder %s123, %s125
      %p132 = scmp.eq.s32.totalorder %s19, 5
      %p133 = por %p131, %p132
      %p134 = scmp.ne.s32.totalorder %s125, %s126
      %p135 = scmp.eq.s32.totalorder %s19, 0
      %p136 = por %p134, %p135
      %p137 = scmp.ne.s32.totalorder %s125, %s126
      %p138 = scmp.eq.s32.totalorder %s20, 5
      %p139 = por %p137, %p138
      %p141 = scmp.ne.s32.totalorder %s126, %s140
      %p142 = scmp.eq.s32.totalorder %s20, 0
      %p143 = por %p141, %p142
      %s144 = ssub.s32 %s21, %s33
      %s145 = ssub.s32 %s22, %s29
      %s146 = sor.u32 %s144, %s145
      %p147 = scmp.eq.s32.totalorder %s146, 0
      %s149 = sadd.s32 %s148, 1
      %s150 = scalar_select %p147, %s148, %s149
      %p153 = pneg %p147
      %p154 = scmp.eq.s32.totalorder %s14, 5
      %p155 = por %p153, %p154
      %p156 = scmp.ne.s32.totalorder %s148, %s151
      %p157 = scmp.eq.s32.totalorder %s14, 0
      %p158 = por %p156, %p157
      %p159 = scmp.ne.s32.totalorder %s148, %s151
      %p160 = scmp.eq.s32.totalorder %s19, 5
      %p161 = por %p159, %p160
      %p162 = scmp.ne.s32.totalorder %s151, %s152
      %p163 = scmp.eq.s32.totalorder %s19, 0
      %p164 = por %p162, %p163
      %p165 = scmp.ne.s32.totalorder %s151, %s152
      %p166 = scmp.eq.s32.totalorder %s20, 5
      %p167 = por %p165, %p166
      %p169 = scmp.ne.s32.totalorder %s152, %s168
      %p170 = scmp.eq.s32.totalorder %s20, 0
      %p171 = por %p169, %p170
      %p172 = scmp.le.s32.totalorder 1, %s14
      %p173 = scmp.lt.s32.totalorder %s14, 7
      %p174 = pnand %p172, %p173
      %p175 = pneg %p174
      // Predicated region
      $region9: #{tpu_custom_call.1} parent=5 // pred_check
        _
      $region10: #{tpu_custom_call.1} parent=5 // pred_check_branch
        %177 = sbr.rel (%p174) target = $region12
      $region11: #{tpu_custom_call.1} parent=5 // pred_region
        %s178 = ssub.s32 %s14, 1
        // Predicated region
        $region13: #{tpu_custom_call.1} parent=11 // pred_check
          %p179 = pneg %p73
        $region14: #{tpu_custom_call.1} parent=11 // pred_check_branch
          %181 = sbr.rel (%p179) target = $region16
        $region15: #{tpu_custom_call.1} parent=11 // pred_region
          _
        $region16: #{tpu_custom_call.1} parent=11 // pred_fallthru
          _
        // Predicated region
        $region17: #{tpu_custom_call.1} parent=11 // pred_check
          %p182 = pneg %p94
        $region18: #{tpu_custom_call.1} parent=11 // pred_check_branch
          %184 = sbr.rel (%p182) target = $region20
        $region19: #{tpu_custom_call.1} parent=11 // pred_region
          _
        $region20: #{tpu_custom_call.1} parent=11 // pred_fallthru
          _
        // Predicated region
        $region21: #{tpu_custom_call.1} parent=11 // pred_check
          %p185 = pneg %p115
        $region22: #{tpu_custom_call.1} parent=11 // pred_check_branch
          %187 = sbr.rel (%p185) target = $region24
        $region23: #{tpu_custom_call.1} parent=11 // pred_region
          _
        $region24: #{tpu_custom_call.1} parent=11 // pred_fallthru
          _
        // Predicated region
        $region25: #{tpu_custom_call.1} parent=11 // pred_check
          %p188 = pneg %p136
        $region26: #{tpu_custom_call.1} parent=11 // pred_check_branch
          %190 = sbr.rel (%p188) target = $region28
        $region27: #{tpu_custom_call.1} parent=11 // pred_region
          _
        $region28: #{tpu_custom_call.1} parent=11 // pred_fallthru
          _
      $region12: #{tpu_custom_call.1} parent=5 // pred_fallthru
        _
      %p191 = scmp.lt.s32.totalorder %s14, 6
      // Predicated region
      $region29: #{tpu_custom_call.1} parent=5 // pred_check
        %p192 = pneg %p191
      $region30: #{tpu_custom_call.1} parent=5 // pred_check_branch
        %194 = sbr.rel (%p192) target = $region32
      $region31: #{tpu_custom_call.1} parent=5 // pred_region
        // Predicated region
        $region33: #{tpu_custom_call.1} parent=31 // pred_check
          %p195 = pneg %p46
        $region34: #{tpu_custom_call.1} parent=31 // pred_check_branch
          %197 = sbr.rel (%p195) target = $region36
        $region35: #{tpu_custom_call.1} parent=31 // pred_region
          %p198 = scmp.lt.s32.totalorder %s21, 1
          %s199 = scalar_select %p198, %s21, 1
          %s200 = smul.addr %s199, 12
          %s201 = smul.addr %s200, 8
          %s202 = scalar_lea.vmem %s0, %s201
        $region36: #{tpu_custom_call.1} parent=31 // pred_fallthru
          _
      $region32: #{tpu_custom_call.1} parent=5 // pred_fallthru
        _
      %p203 = scmp.le.s32.totalorder 1, %s14
      %p204 = scmp.lt.s32.totalorder %s14, 7
      %p205 = pnand %p203, %p204
      %p206 = pneg %p205
      // Predicated region
      $region37: #{tpu_custom_call.1} parent=5 // pred_check
        _
      $region38: #{tpu_custom_call.1} parent=5 // pred_check_branch
        %208 = sbr.rel (%p205) target = $region40
      $region39: #{tpu_custom_call.1} parent=5 // pred_region
        %s209 = ssub.s32 %s14, 1
        %p210 = scmp.lt.s32.totalorder %s23, 1
        %s211 = scalar_select %p210, %s23, 1
        %s212 = smul.addr %s211, 12
        %s213 = smul.addr %s212, 8
        %s214 = scalar_lea.vmem %s0, %s213
        %p215 = pneg %p52
        %p216 = pneg %p49
        %p217 = pneg %p73
        %p218 = pneg %p70
        %p219 = pneg %p94
        %p220 = pneg %p91
        %p221 = pneg %p115
        %p222 = pneg %p112
        %p223 = pneg %p136
        %p224 = pneg %p133
        %p225 = pneg %p164
        %p226 = pneg %p161
        %s227 = sand.u32 %s151, 1
        %s228 = scalar_lea.sflag [#allocation3], %s227
        %s229 = sand.u32 %s151, 1
        %s230 = smul.addr %s229, 16
        %s231 = scalar_lea.vmem [#allocation2], %s230
        %p232 = scmp.lt.s32.totalorder %s23, 1
        %s233 = scalar_select %p232, %s23, 1
        %s234 = smul.addr %s233, 12
        %s235 = smul.addr %s234, 8
        %s236 = scalar_lea.vmem %s0, %s235
        %s237 = smul.u32 %s24, 96
        %s238 = scalar_lea.vmem %s1, %s237
        %v239 = vld [vmem:[%s238] sm:$0xff]
        %v240 = vld [vmem:[%s238 + $0x8] sm:$0xff]
        %v241 = vld [vmem:[%s238 + $0x10] sm:$0xff]
        %v242 = vld [vmem:[%s238 + $0x18] sm:$0xff]
        %v243 = vld [vmem:[%s238 + $0x20] sm:$0xff]
        %v244 = vld [vmem:[%s238 + $0x28] sm:$0xff]
        %v245 = vld [vmem:[%s238 + $0x30] sm:$0xff]
        %v246 = vld [vmem:[%s238 + $0x38] sm:$0xff]
        %v247 = vld [vmem:[%s238 + $0x40] sm:$0xff]
        %v248 = vld [vmem:[%s238 + $0x48] sm:$0xff]
        %v249 = vld [vmem:[%s238 + $0x50] sm:$0xff]
        %v250 = vld [vmem:[%s238 + $0x58] sm:$0xff]
        %v251 = vld [vmem:[%s236] sm:$0xff]
        %v252 = vld [vmem:[%s236 + $0x8] sm:$0xff]
        %v253 = vld [vmem:[%s236 + $0x10] sm:$0xff]
        %v254 = vld [vmem:[%s236 + $0x18] sm:$0xff]
        %v255 = vld [vmem:[%s236 + $0x20] sm:$0xff]
        %v256 = vld [vmem:[%s236 + $0x28] sm:$0xff]
        %v257 = vld [vmem:[%s236 + $0x30] sm:$0xff]
        %v258 = vld [vmem:[%s236 + $0x38] sm:$0xff]
        %v259 = vld [vmem:[%s236 + $0x40] sm:$0xff]
        %v260 = vld [vmem:[%s236 + $0x48] sm:$0xff]
        %v261 = vld [vmem:[%s236 + $0x50] sm:$0xff]
        %v262 = vld [vmem:[%s236 + $0x58] sm:$0xff]
        %v263 = vmul.f32 %v239, %v251
        %v264 = vmul.f32 %v240, %v252
        %v265 = vmul.f32 %v241, %v253
        %v266 = vmul.f32 %v242, %v254
        %v267 = vmul.f32 %v243, %v255
        %v268 = vmul.f32 %v244, %v256
        %v269 = vmul.f32 %v245, %v257
        %v270 = vmul.f32 %v246, %v258
        %v271 = vmul.f32 %v247, %v259
        %v272 = vmul.f32 %v248, %v260
        %v273 = vmul.f32 %v249, %v261
        %v274 = vmul.f32 %v250, %v262
        %v275 = vld [vmem:[%s2] sm:$0xff]
        %v276 = vld [vmem:[%s2 + $0x8] sm:$0xff]
        %v277 = vld [vmem:[%s2 + $0x10] sm:$0xff]
        %v278 = vld [vmem:[%s2 + $0x18] sm:$0xff]
        %vm279 = vcmask 261120
        %v281 = vsel %vm279, %v275, 0
        %v284 = vsel %vm279, %v276, 0
        %v287 = vsel %vm279, %v277, 0
        %v290 = vsel %vm279, %v278, 0
        %292 = vmatprep.subr.mxu0 0.0
        %293 = vmatpush1.msra.mxu0 %v263
        %294 = vmatprep.subr.mxu0 0.0
        %295 = vmatpush1.msra.mxu0 %v264
        %296 = vmatprep.subr.mxu0 0.0
        %297 = vmatpush1.msra.mxu0 %v265
        %298 = vmatprep.subr.mxu0 0.0
        %299 = vmatpush1.msra.mxu0 %v266
        %300 = vmatprep.subr.mxu0 0.0
        %301 = vmatpush1.msra.mxu0 0.0
        %302 = vmatprep.subr.mxu0 0.0
        %303 = vmatpush1.msra.mxu0 0.0
        %304 = vmatprep.subr.mxu0 0.0
        %305 = vmatpush1.msra.mxu0 0.0
        %306 = vmatprep.subr.mxu0 0.0
        %307 = vmatpush1.msra.mxu0 0.0
        %308 = vmatprep.subr.mxu0 0.0
        %309 = vmatpush1.msra.mxu0 0.0
        %310 = vmatprep.subr.mxu0 0.0
        %311 = vmatpush1.msra.mxu0 0.0
        %312 = vmatprep.subr.mxu0 0.0
        %313 = vmatpush1.msra.mxu0 0.0
        %314 = vmatprep.subr.mxu0 0.0
        %315 = vmatpush1.msra.mxu0 0.0
        %316 = vmatprep.subr.mxu0 0.0
        %317 = vmatpush1.msra.mxu0 0.0
        %318 = vmatprep.subr.mxu0 0.0
        %319 = vmatpush1.msra.mxu0 0.0
        %320 = vmatprep.subr.mxu0 0.0
        %321 = vmatpush1.msra.mxu0 0.0
        %322 = vmatprep.subr.mxu0 0.0
        %323 = vmatpush1.msra.mxu0 0.0
        %324 = vmatprep.subr.mxu0 0.0
        %325 = vmatpush1.msra.mxu0 0.0
        %326 = vmatprep.subr.mxu0 0.0
        %327 = vmatpush1.msra.mxu0 0.0
        %328 = vmatprep.subr.mxu0 0.0
        %329 = vmatpush1.msra.mxu0 0.0
        %330 = vmatprep.subr.mxu0 0.0
        %331 = vmatpush1.msra.mxu0 0.0
        %332 = vmatprep.subr.mxu0 0.0
        %333 = vmatpush1.msra.mxu0 0.0
        %334 = vmatprep.subr.mxu0 0.0
        %335 = vmatpush1.msra.mxu0 0.0
        %336 = vmatprep.subr.mxu0 0.0
        %337 = vmatpush1.msra.mxu0 0.0
        %338 = vmatprep.subr.mxu0 0.0
        %339 = vmatpush1.msra.mxu0 0.0
        %340 = vmatprep.subr.mxu0 0.0
        %341 = vmatpush1.msra.mxu0 0.0
        %342 = vmatprep.subr.mxu0 0.0
        %343 = vmatpush1.msra.mxu0 0.0
        %344 = vmatprep.subr.mxu0 0.0
        %345 = vmatpush1.msra.mxu0 0.0
        %346 = vmatprep.subr.mxu0 0.0
        %347 = vmatpush1.msra.mxu0 0.0
        %348 = vmatprep.subr.mxu0 0.0
        %349 = vmatpush1.msra.mxu0 0.0
        %350 = vmatprep.subr.mxu0 0.0
        %351 = vmatpush1.msra.mxu0 0.0
        %352 = vmatprep.subr.mxu0 0.0
        %353 = vmatpush1.msra.mxu0 0.0
        %354 = vmatprep.subr.mxu0 0.0
        %355 = vmatpush1.msra.mxu0 0.0
        %356 = vmatprep.mubr.f32.mxu0 0.0
        %357 = vmatmul.mubr.f32.gmra.mrb[0].mxu0 %v281
        %v358 = vpop.f32.mrb[0].mxu0
        %v359 = vadd.f32 0.0, %v358
        %v360 = vpop.f32.mrb[0].mxu0
        %361 = vmatprep.mubr.f32.mxu0 0.0
        %362 = vmatmul.mubr.f32.gmra.mrb[0].mxu0 %v284
        %v363 = vpop.f32.mrb[0].mxu0
        %v364 = vadd.f32 0.0, %v363
        %v365 = vpop.f32.mrb[0].mxu0
        %366 = vmatprep.mubr.f32.mxu0 0.0
        %367 = vmatmul.mubr.f32.gmra.mrb[0].mxu0 %v287
        %v368 = vpop.f32.mrb[0].mxu0
        %v369 = vadd.f32 0.0, %v368
        %v370 = vpop.f32.mrb[0].mxu0
        %371 = vmatprep.mubr.f32.mxu0 0.0
        %372 = vmatmul.mubr.f32.gmra.mrb[0].mxu0 %v290
        %v373 = vpop.f32.mrb[0].mxu0
        %v374 = vadd.f32 0.0, %v373
        %v375 = vpop.f32.mrb[0].mxu0
        %376 = vdwg.mxu0
        %377 = vmatprep.subr.mxu0 0.0
        %378 = vmatpush1.msra.mxu0 %v267
        %379 = vmatprep.subr.mxu0 0.0
        %380 = vmatpush1.msra.mxu0 %v268
        %381 = vmatprep.subr.mxu0 0.0
        %382 = vmatpush1.msra.mxu0 %v269
        %383 = vmatprep.subr.mxu0 0.0
        %384 = vmatpush1.msra.mxu0 %v270
        %385 = vmatprep.subr.mxu0 0.0
        %386 = vmatpush1.msra.mxu0 0.0
        %387 = vmatprep.subr.mxu0 0.0
        %388 = vmatpush1.msra.mxu0 0.0
        %389 = vmatprep.subr.mxu0 0.0
        %390 = vmatpush1.msra.mxu0 0.0
        %391 = vmatprep.subr.mxu0 0.0
        %392 = vmatpush1.msra.mxu0 0.0
        %393 = vmatprep.subr.mxu0 0.0
        %394 = vmatpush1.msra.mxu0 0.0
        %395 = vmatprep.subr.mxu0 0.0
        %396 = vmatpush1.msra.mxu0 0.0
        %397 = vmatprep.subr.mxu0 0.0
        %398 = vmatpush1.msra.mxu0 0.0
        %399 = vmatprep.subr.mxu0 0.0
        %400 = vmatpush1.msra.mxu0 0.0
        %401 = vmatprep.subr.mxu0 0.0
        %402 = vmatpush1.msra.mxu0 0.0
        %403 = vmatprep.subr.mxu0 0.0
        %404 = vmatpush1.msra.mxu0 0.0
        %405 = vmatprep.subr.mxu0 0.0
        %406 = vmatpush1.msra.mxu0 0.0
        %407 = vmatprep.subr.mxu0 0.0
        %408 = vmatpush1.msra.mxu0 0.0
        %409 = vmatprep.subr.mxu0 0.0
        %410 = vmatpush1.msra.mxu0 0.0
        %411 = vmatprep.subr.mxu0 0.0
        %412 = vmatpush1.msra.mxu0 0.0
        %413 = vmatprep.subr.mxu0 0.0
        %414 = vmatpush1.msra.mxu0 0.0
        %415 = vmatprep.subr.mxu0 0.0
        %416 = vmatpush1.msra.mxu0 0.0
        %417 = vmatprep.subr.mxu0 0.0
        %418 = vmatpush1.msra.mxu0 0.0
        %419 = vmatprep.subr.mxu0 0.0
        %420 = vmatpush1.msra.mxu0 0.0
        %421 = vmatprep.subr.mxu0 0.0
        %422 = vmatpush1.msra.mxu0 0.0
        %423 = vmatprep.subr.mxu0 0.0
        %424 = vmatpush1.msra.mxu0 0.0
        %425 = vmatprep.subr.mxu0 0.0
        %426 = vmatpush1.msra.mxu0 0.0
        %427 = vmatprep.subr.mxu0 0.0
        %428 = vmatpush1.msra.mxu0 0.0
        %429 = vmatprep.subr.mxu0 0.0
        %430 = vmatpush1.msra.mxu0 0.0
        %431 = vmatprep.subr.mxu0 0.0
        %432 = vmatpush1.msra.mxu0 0.0
        %433 = vmatprep.subr.mxu0 0.0
        %434 = vmatpush1.msra.mxu0 0.0
        %435 = vmatprep.subr.mxu0 0.0
        %436 = vmatpush1.msra.mxu0 0.0
        %437 = vmatprep.subr.mxu0 0.0
        %438 = vmatpush1.msra.mxu0 0.0
        %439 = vmatprep.subr.mxu0 0.0
        %440 = vmatpush1.msra.mxu0 0.0
        %441 = vmatprep.mubr.f32.mxu0 0.0
        %442 = vmatmul.mubr.f32.gmra.mrb[0].mxu0 %v281
        %v443 = vpop.f32.mrb[0].mxu0
        %v444 = vadd.f32 0.0, %v443
        %v445 = vpop.f32.mrb[0].mxu0
        %446 = vmatprep.mubr.f32.mxu0 0.0
        %447 = vmatmul.mubr.f32.gmra.mrb[0].mxu0 %v284
        %v448 = vpop.f32.mrb[0].mxu0
        %v449 = vadd.f32 0.0, %v448
        %v450 = vpop.f32.mrb[0].mxu0
        %451 = vmatprep.mubr.f32.mxu0 0.0
        %452 = vmatmul.mubr.f32.gmra.mrb[0].mxu0 %v287
        %v453 = vpop.f32.mrb[0].mxu0
        %v454 = vadd.f32 0.0, %v453
        %v455 = vpop.f32.mrb[0].mxu0
        %456 = vmatprep.mubr.f32.mxu0 0.0
        %457 = vmatmul.mubr.f32.gmra.mrb[0].mxu0 %v290
        %v458 = vpop.f32.mrb[0].mxu0
        %v459 = vadd.f32 0.0, %v458
        %v460 = vpop.f32.mrb[0].mxu0
        %461 = vdwg.mxu0
        %462 = vmatprep.subr.mxu0 0.0
        %463 = vmatpush1.msra.mxu0 %v271
        %464 = vmatprep.subr.mxu0 0.0
        %465 = vmatpush1.msra.mxu0 %v272
        %466 = vmatprep.subr.mxu0 0.0
        %467 = vmatpush1.msra.mxu0 %v273
        %468 = vmatprep.subr.mxu0 0.0
        %469 = vmatpush1.msra.mxu0 %v274
        %470 = vmatprep.subr.mxu0 0.0
        %471 = vmatpush1.msra.mxu0 0.0
        %472 = vmatprep.subr.mxu0 0.0
        %473 = vmatpush1.msra.mxu0 0.0
        %474 = vmatprep.subr.mxu0 0.0
        %475 = vmatpush1.msra.mxu0 0.0
        %476 = vmatprep.subr.mxu0 0.0
        %477 = vmatpush1.msra.mxu0 0.0
        %478 = vmatprep.subr.mxu0 0.0
        %479 = vmatpush1.msra.mxu0 0.0
        %480 = vmatprep.subr.mxu0 0.0
        %481 = vmatpush1.msra.mxu0 0.0
        %482 = vmatprep.subr.mxu0 0.0
        %483 = vmatpush1.msra.mxu0 0.0
        %484 = vmatprep.subr.mxu0 0.0
        %485 = vmatpush1.msra.mxu0 0.0
        %486 = vmatprep.subr.mxu0 0.0
        %487 = vmatpush1.msra.mxu0 0.0
        %488 = vmatprep.subr.mxu0 0.0
        %489 = vmatpush1.msra.mxu0 0.0
        %490 = vmatprep.subr.mxu0 0.0
        %491 = vmatpush1.msra.mxu0 0.0
        %492 = vmatprep.subr.mxu0 0.0
        %493 = vmatpush1.msra.mxu0 0.0
        %494 = vmatprep.subr.mxu0 0.0
        %495 = vmatpush1.msra.mxu0 0.0
        %496 = vmatprep.subr.mxu0 0.0
        %497 = vmatpush1.msra.mxu0 0.0
        %498 = vmatprep.subr.mxu0 0.0
        %499 = vmatpush1.msra.mxu0 0.0
        %500 = vmatprep.subr.mxu0 0.0
        %501 = vmatpush1.msra.mxu0 0.0
        %502 = vmatprep.subr.mxu0 0.0
        %503 = vmatpush1.msra.mxu0 0.0
        %504 = vmatprep.subr.mxu0 0.0
        %505 = vmatpush1.msra.mxu0 0.0
        %506 = vmatprep.subr.mxu0 0.0
        %507 = vmatpush1.msra.mxu0 0.0
        %508 = vmatprep.subr.mxu0 0.0
        %509 = vmatpush1.msra.mxu0 0.0
        %510 = vmatprep.subr.mxu0 0.0
        %511 = vmatpush1.msra.mxu0 0.0
        %512 = vmatprep.subr.mxu0 0.0
        %513 = vmatpush1.msra.mxu0 0.0
        %514 = vmatprep.subr.mxu0 0.0
        %515 = vmatpush1.msra.mxu0 0.0
        %516 = vmatprep.subr.mxu0 0.0
        %517 = vmatpush1.msra.mxu0 0.0
        %518 = vmatprep.subr.mxu0 0.0
        %519 = vmatpush1.msra.mxu0 0.0
        %520 = vmatprep.subr.mxu0 0.0
        %521 = vmatpush1.msra.mxu0 0.0
        %522 = vmatprep.subr.mxu0 0.0
        %523 = vmatpush1.msra.mxu0 0.0
        %524 = vmatprep.subr.mxu0 0.0
        %525 = vmatpush1.msra.mxu0 0.0
        %526 = vmatprep.mubr.f32.mxu0 0.0
        %527 = vmatmul.mubr.f32.gmra.mrb[0].mxu0 %v281
        %v528 = vpop.f32.mrb[0].mxu0
        %v529 = vadd.f32 0.0, %v528
        %v530 = vpop.f32.mrb[0].mxu0
        %531 = vmatprep.mubr.f32.mxu0 0.0
        %532 = vmatmul.mubr.f32.gmra.mrb[0].mxu0 %v284
        %v533 = vpop.f32.mrb[0].mxu0
        %v534 = vadd.f32 0.0, %v533
        %v535 = vpop.f32.mrb[0].mxu0
        %536 = vmatprep.mubr.f32.mxu0 0.0
        %537 = vmatmul.mubr.f32.gmra.mrb[0].mxu0 %v287
        %v538 = vpop.f32.mrb[0].mxu0
        %v539 = vadd.f32 0.0, %v538
        %v540 = vpop.f32.mrb[0].mxu0
        %541 = vmatprep.mubr.f32.mxu0 0.0
        %542 = vmatmul.mubr.f32.gmra.mrb[0].mxu0 %v290
        %v543 = vpop.f32.mrb[0].mxu0
        %v544 = vadd.f32 0.0, %v543
        %v545 = vpop.f32.mrb[0].mxu0
        %546 = vdwg.mxu0
        %v547 = vld [vmem:[%s3] sm:$0xff]
        %v548 = vld [vmem:[%s3 + $0x8] sm:$0xff]
        %vm549 = vcmask 130048
        %v551 = vsel %vm549, %v359, 0
        %v554 = vsel %vm549, %v364, 0
        %v557 = vsel %vm549, %v444, 0
        %v560 = vsel %vm549, %v449, 0
        %v563 = vsel %vm549, %v529, 0
        %v566 = vsel %vm549, %v534, 0
        %568 = vmatprep.subr.mxu0 0.0
        %569 = vmatpush1.msra.mxu0 %v547
        %570 = vmatprep.subr.mxu0 0.0
        %571 = vmatpush1.msra.mxu0 %v548
        %572 = vmatprep.subr.mxu0 0.0
        %573 = vmatpush1.msra.mxu0 0.0
        %574 = vmatprep.subr.mxu0 0.0
        %575 = vmatpush1.msra.mxu0 0.0
        %576 = vmatprep.subr.mxu0 0.0
        %577 = vmatpush1.msra.mxu0 0.0
        %578 = vmatprep.subr.mxu0 0.0
        %579 = vmatpush1.msra.mxu0 0.0
        %580 = vmatprep.subr.mxu0 0.0
        %581 = vmatpush1.msra.mxu0 0.0
        %582 = vmatprep.subr.mxu0 0.0
        %583 = vmatpush1.msra.mxu0 0.0
        %584 = vmatprep.subr.mxu0 0.0
        %585 = vmatpush1.msra.mxu0 0.0
        %586 = vmatprep.subr.mxu0 0.0
        %587 = vmatpush1.msra.mxu0 0.0
        %588 = vmatprep.subr.mxu0 0.0
        %589 = vmatpush1.msra.mxu0 0.0
        %590 = vmatprep.subr.mxu0 0.0
        %591 = vmatpush1.msra.mxu0 0.0
        %592 = vmatprep.subr.mxu0 0.0
        %593 = vmatpush1.msra.mxu0 0.0
        %594 = vmatprep.subr.mxu0 0.0
        %595 = vmatpush1.msra.mxu0 0.0
        %596 = vmatprep.subr.mxu0 0.0
        %597 = vmatpush1.msra.mxu0 0.0
        %598 = vmatprep.subr.mxu0 0.0
        %599 = vmatpush1.msra.mxu0 0.0
        %600 = vmatprep.subr.mxu0 0.0
        %601 = vmatpush1.msra.mxu0 0.0
        %602 = vmatprep.subr.mxu0 0.0
        %603 = vmatpush1.msra.mxu0 0.0
        %604 = vmatprep.subr.mxu0 0.0
        %605 = vmatpush1.msra.mxu0 0.0
        %606 = vmatprep.subr.mxu0 0.0
        %607 = vmatpush1.msra.mxu0 0.0
        %608 = vmatprep.subr.mxu0 0.0
        %609 = vmatpush1.msra.mxu0 0.0
        %610 = vmatprep.subr.mxu0 0.0
        %611 = vmatpush1.msra.mxu0 0.0
        %612 = vmatprep.subr.mxu0 0.0
        %613 = vmatpush1.msra.mxu0 0.0
        %614 = vmatprep.subr.mxu0 0.0
        %615 = vmatpush1.msra.mxu0 0.0
        %616 = vmatprep.subr.mxu0 0.0
        %617 = vmatpush1.msra.mxu0 0.0
        %618 = vmatprep.subr.mxu0 0.0
        %619 = vmatpush1.msra.mxu0 0.0
        %620 = vmatprep.subr.mxu0 0.0
        %621 = vmatpush1.msra.mxu0 0.0
        %622 = vmatprep.subr.mxu0 0.0
        %623 = vmatpush1.msra.mxu0 0.0
        %624 = vmatprep.subr.mxu0 0.0
        %625 = vmatpush1.msra.mxu0 0.0
        %626 = vmatprep.subr.mxu0 0.0
        %627 = vmatpush1.msra.mxu0 0.0
        %628 = vmatprep.subr.mxu0 0.0
        %629 = vmatpush1.msra.mxu0 0.0
        %630 = vmatprep.subr.mxu0 0.0
        %631 = vmatpush1.msra.mxu0 0.0
        %632 = vmatprep.mubr.f32.mxu0 0.0
        %633 = vmatmul.mubr.f32.gmra.mrb[0].mxu0 %v551
        %v634 = vpop.f32.mrb[0].mxu0
        %v635 = vadd.f32 0.0, %v634
        %v636 = vpop.f32.mrb[0].mxu0
        %637 = vmatprep.mubr.f32.mxu0 0.0
        %638 = vmatmul.mubr.f32.gmra.mrb[0].mxu0 %v554
        %v639 = vpop.f32.mrb[0].mxu0
        %v640 = vadd.f32 0.0, %v639
        %v641 = vpop.f32.mrb[0].mxu0
        %642 = vmatprep.mubr.f32.mxu0 0.0
        %643 = vmatmul.mubr.f32.gmra.mrb[0].mxu0 %v557
        %v644 = vpop.f32.mrb[0].mxu0
        %v645 = vadd.f32 0.0, %v644
        %v646 = vpop.f32.mrb[0].mxu0
        %647 = vmatprep.mubr.f32.mxu0 0.0
        %648 = vmatmul.mubr.f32.gmra.mrb[0].mxu0 %v560
        %v649 = vpop.f32.mrb[0].mxu0
        %v650 = vadd.f32 0.0, %v649
        %v651 = vpop.f32.mrb[0].mxu0
        %652 = vmatprep.mubr.f32.mxu0 0.0
        %653 = vmatmul.mubr.f32.gmra.mrb[0].mxu0 %v563
        %v654 = vpop.f32.mrb[0].mxu0
        %v655 = vadd.f32 0.0, %v654
        %v656 = vpop.f32.mrb[0].mxu0
        %657 = vmatprep.mubr.f32.mxu0 0.0
        %658 = vmatmul.mubr.f32.gmra.mrb[0].mxu0 %v566
        %v659 = vpop.f32.mrb[0].mxu0
        %v660 = vadd.f32 0.0, %v659
        %v661 = vpop.f32.mrb[0].mxu0
        %662 = vdwg.mxu0
        %v663 = vld [vmem:[%s4] sm:$0xff]
        %v664 = vld [vmem:[%s4 + $0x8] sm:$0xff]
        %v666 = vsel %vm549, %v369, 0
        %v669 = vsel %vm549, %v374, 0
        %v672 = vsel %vm549, %v454, 0
        %v675 = vsel %vm549, %v459, 0
        %v678 = vsel %vm549, %v539, 0
        %v681 = vsel %vm549, %v544, 0
        %683 = vmatprep.subr.mxu0 0.0
        %684 = vmatpush1.msra.mxu0 %v663
        %685 = vmatprep.subr.mxu0 0.0
        %686 = vmatpush1.msra.mxu0 %v664
        %687 = vmatprep.subr.mxu0 0.0
        %688 = vmatpush1.msra.mxu0 0.0
        %689 = vmatprep.subr.mxu0 0.0
        %690 = vmatpush1.msra.mxu0 0.0
        %691 = vmatprep.subr.mxu0 0.0
        %692 = vmatpush1.msra.mxu0 0.0
        %693 = vmatprep.subr.mxu0 0.0
        %694 = vmatpush1.msra.mxu0 0.0
        %695 = vmatprep.subr.mxu0 0.0
        %696 = vmatpush1.msra.mxu0 0.0
        %697 = vmatprep.subr.mxu0 0.0
        %698 = vmatpush1.msra.mxu0 0.0
        %699 = vmatprep.subr.mxu0 0.0
        %700 = vmatpush1.msra.mxu0 0.0
        %701 = vmatprep.subr.mxu0 0.0
        %702 = vmatpush1.msra.mxu0 0.0
        %703 = vmatprep.subr.mxu0 0.0
        %704 = vmatpush1.msra.mxu0 0.0
        %705 = vmatprep.subr.mxu0 0.0
        %706 = vmatpush1.msra.mxu0 0.0
        %707 = vmatprep.subr.mxu0 0.0
        %708 = vmatpush1.msra.mxu0 0.0
        %709 = vmatprep.subr.mxu0 0.0
        %710 = vmatpush1.msra.mxu0 0.0
        %711 = vmatprep.subr.mxu0 0.0
        %712 = vmatpush1.msra.mxu0 0.0
        %713 = vmatprep.subr.mxu0 0.0
        %714 = vmatpush1.msra.mxu0 0.0
        %715 = vmatprep.subr.mxu0 0.0
        %716 = vmatpush1.msra.mxu0 0.0
        %717 = vmatprep.subr.mxu0 0.0
        %718 = vmatpush1.msra.mxu0 0.0
        %719 = vmatprep.subr.mxu0 0.0
        %720 = vmatpush1.msra.mxu0 0.0
        %721 = vmatprep.subr.mxu0 0.0
        %722 = vmatpush1.msra.mxu0 0.0
        %723 = vmatprep.subr.mxu0 0.0
        %724 = vmatpush1.msra.mxu0 0.0
        %725 = vmatprep.subr.mxu0 0.0
        %726 = vmatpush1.msra.mxu0 0.0
        %727 = vmatprep.subr.mxu0 0.0
        %728 = vmatpush1.msra.mxu0 0.0
        %729 = vmatprep.subr.mxu0 0.0
        %730 = vmatpush1.msra.mxu0 0.0
        %731 = vmatprep.subr.mxu0 0.0
        %732 = vmatpush1.msra.mxu0 0.0
        %733 = vmatprep.subr.mxu0 0.0
        %734 = vmatpush1.msra.mxu0 0.0
        %735 = vmatprep.subr.mxu0 0.0
        %736 = vmatpush1.msra.mxu0 0.0
        %737 = vmatprep.subr.mxu0 0.0
        %738 = vmatpush1.msra.mxu0 0.0
        %739 = vmatprep.subr.mxu0 0.0
        %740 = vmatpush1.msra.mxu0 0.0
        %741 = vmatprep.subr.mxu0 0.0
        %742 = vmatpush1.msra.mxu0 0.0
        %743 = vmatprep.subr.mxu0 0.0
        %744 = vmatpush1.msra.mxu0 0.0
        %745 = vmatprep.subr.mxu0 0.0
        %746 = vmatpush1.msra.mxu0 0.0
        %747 = vmatprep.mubr.f32.mxu0 0.0
        %748 = vmatmul.mubr.f32.gmra.mrb[0].mxu0 %v666
        %v749 = vpop.f32.mrb[0].mxu0
        %v750 = vadd.f32 0.0, %v749
        %v751 = vpop.f32.mrb[0].mxu0
        %752 = vmatprep.mubr.f32.mxu0 0.0
        %753 = vmatmul.mubr.f32.gmra.mrb[0].mxu0 %v669
        %v754 = vpop.f32.mrb[0].mxu0
        %v755 = vadd.f32 0.0, %v754
        %v756 = vpop.f32.mrb[0].mxu0
        %757 = vmatprep.mubr.f32.mxu0 0.0
        %758 = vmatmul.mubr.f32.gmra.mrb[0].mxu0 %v672
        %v759 = vpop.f32.mrb[0].mxu0
        %v760 = vadd.f32 0.0, %v759
        %v761 = vpop.f32.mrb[0].mxu0
        %762 = vmatprep.mubr.f32.mxu0 0.0
        %763 = vmatmul.mubr.f32.gmra.mrb[0].mxu0 %v675
        %v764 = vpop.f32.mrb[0].mxu0
        %v765 = vadd.f32 0.0, %v764
        %v766 = vpop.f32.mrb[0].mxu0
        %767 = vmatprep.mubr.f32.mxu0 0.0
        %768 = vmatmul.mubr.f32.gmra.mrb[0].mxu0 %v678
        %v769 = vpop.f32.mrb[0].mxu0
        %v770 = vadd.f32 0.0, %v769
        %v771 = vpop.f32.mrb[0].mxu0
        %772 = vmatprep.mubr.f32.mxu0 0.0
        %773 = vmatmul.mubr.f32.gmra.mrb[0].mxu0 %v681
        %v774 = vpop.f32.mrb[0].mxu0
        %v775 = vadd.f32 0.0, %v774
        %v776 = vpop.f32.mrb[0].mxu0
        %777 = vdwg.mxu0
        %v778 = vsub.f32 %v635, %v750
        %v779 = vsub.f32 %v640, %v755
        %v780 = vsub.f32 %v645, %v760
        %v781 = vsub.f32 %v650, %v765
        %v782 = vsub.f32 %v655, %v770
        %v783 = vsub.f32 %v660, %v775
        %v784 = vmul.f32 %v780, %v780
        %v785 = vmul.f32 %v781, %v781
        %v786 = vmul.f32 %v782, %v782
        %v787 = vmul.f32 %v783, %v783
        %v788 = vadd.f32 %v784, %v786
        %v789 = vadd.f32 %v785, %v787
        %v790 = vrsqrt.pop %v788
        %v791 = vmul.f32 %v788, %v790
        %vm792 = vcmp.eq.f32.partialorder %v788, inf
        %v793 = vsel %vm792, %v788, %v791
        %vm794 = vcmp.eq.f32.partialorder %v788, 0.0
        %v795 = vand.u32 %v788, 2147483648
        %v796 = vsel %vm794, %v795, %v793
        %v797 = vrsqrt.pop %v789
        %v798 = vmul.f32 %v789, %v797
        %vm799 = vcmp.eq.f32.partialorder %v789, inf
        %v800 = vsel %vm799, %v789, %v798
        %vm801 = vcmp.eq.f32.partialorder %v789, 0.0
        %v802 = vand.u32 %v789, 2147483648
        %v803 = vsel %vm801, %v802, %v800
        %v804 = vadd.f32 %v796, 1e-06
        %v805 = vadd.f32 %v803, 1e-06
        %v806 = vand.u32 2147483647, %v804
        %v807 = vand.u32 2147483647, %v778
        %v808 = vmin.f32 %v806, %v807
        %v809 = vmax.f32 %v806, %v807
        %v810 = vrcp.pop %v809
        %v811 = vmul.f32 %v808, %v810
        %v812 = vmul.f32 %v811, %v811
        %v813 = vmul.f32 0.002785687, %v812
        %v814 = vadd.f32 %v813, -0.015866
        %v815 = vmul.f32 %v814, %v812
        %v816 = vadd.f32 %v815, 0.04247222
        %v817 = vmul.f32 %v816, %v812
        %v818 = vadd.f32 %v817, -0.074975304
        %v819 = vmul.f32 %v818, %v812
        %v820 = vadd.f32 %v819, 0.1064488
        %v821 = vmul.f32 %v820, %v812
        %v822 = vadd.f32 %v821, -0.14207031
        %v823 = vmul.f32 %v822, %v812
        %v824 = vadd.f32 %v823, 0.19993454
        %v825 = vmul.f32 %v824, %v812
        %v826 = vadd.f32 %v825, -0.33333147
        %v827 = vmul.f32 %v826, %v812
        %v828 = vmul.f32 %v827, %v811
        %v829 = vadd.f32 %v828, %v811
        %vm830 = vcmp.gt.f32.partialorder %v807, %v806
        %v831 = vsub.f32 1.5707964, %v829
        %v832 = vsel %vm830, %v831, %v829
        %vm833 = vcmp.lt.f32.partialorder %v804, 0.0
        %v834 = vsub.f32 3.1415927, %v832
        %v835 = vsel %vm833, %v834, %v832
        %vm836 = vcmp.lt.s32.totalorder %v804, 0
        %v837 = vsel %vm836, 3.1415927, 0.0
        %vm838 = vcmp.eq.f32.partialorder %v778, 0.0
        %v839 = vsel %vm838, %v837, %v835
        %vm840 = vcmp.ne.f32.partialorder %v804, %v804
        %vm841 = vcmp.ne.f32.partialorder %v778, %v778
        %vm842 = vmor %vm840, %vm841
        %v843 = vsel %vm842, nan, %v839
        %vm844 = vcmp.lt.f32.partialorder %v804, 0.0
        %v845 = vsel %vm844, 2.3561945, 0.7853982
        %vm846 = vcmp.eq.s32.totalorder %v806, inf
        %vm847 = vcmp.eq.s32.totalorder %v807, inf
        %vm848 = vmand %vm846, %vm847
        %v849 = vsel %vm848, %v845, %v843
        %v850 = vand.u32 2147483647, %v849
        %v851 = vand.u32 %v778, 2147483648
        %v852 = vor.u32 %v850, %v851
        %v853 = vand.u32 2147483647, %v805
        %v854 = vand.u32 2147483647, %v779
        %v855 = vmin.f32 %v853, %v854
        %v856 = vmax.f32 %v853, %v854
        %v857 = vrcp.pop %v856
        %v858 = vmul.f32 %v855, %v857
        %v859 = vmul.f32 %v858, %v858
        %v860 = vmul.f32 0.002785687, %v859
        %v861 = vadd.f32 %v860, -0.015866
        %v862 = vmul.f32 %v861, %v859
        %v863 = vadd.f32 %v862, 0.04247222
        %v864 = vmul.f32 %v863, %v859
        %v865 = vadd.f32 %v864, -0.074975304
        %v866 = vmul.f32 %v865, %v859
        %v867 = vadd.f32 %v866, 0.1064488
        %v868 = vmul.f32 %v867, %v859
        %v869 = vadd.f32 %v868, -0.14207031
        %v870 = vmul.f32 %v869, %v859
        %v871 = vadd.f32 %v870, 0.19993454
        %v872 = vmul.f32 %v871, %v859
        %v873 = vadd.f32 %v872, -0.33333147
        %v874 = vmul.f32 %v873, %v859
        %v875 = vmul.f32 %v874, %v858
        %v876 = vadd.f32 %v875, %v858
        %vm877 = vcmp.gt.f32.partialorder %v854, %v853
        %v878 = vsub.f32 1.5707964, %v876
        %v879 = vsel %vm877, %v878, %v876
        %vm880 = vcmp.lt.f32.partialorder %v805, 0.0
        %v881 = vsub.f32 3.1415927, %v879
        %v882 = vsel %vm880, %v881, %v879
        %vm883 = vcmp.lt.s32.totalorder %v805, 0
        %v884 = vsel %vm883, 3.1415927, 0.0
        %vm885 = vcmp.eq.f32.partialorder %v779, 0.0
        %v886 = vsel %vm885, %v884, %v882
        %vm887 = vcmp.ne.f32.partialorder %v805, %v805
        %vm888 = vcmp.ne.f32.partialorder %v779, %v779
        %vm889 = vmor %vm887, %vm888
        %v890 = vsel %vm889, nan, %v886
        %vm891 = vcmp.lt.f32.partialorder %v805, 0.0
        %v892 = vsel %vm891, 2.3561945, 0.7853982
        %vm893 = vcmp.eq.s32.totalorder %v853, inf
        %vm894 = vcmp.eq.s32.totalorder %v854, inf
        %vm895 = vmand %vm893, %vm894
        %v896 = vsel %vm895, %v892, %v890
        %v897 = vand.u32 2147483647, %v896
        %v898 = vand.u32 %v779, 2147483648
        %v899 = vor.u32 %v897, %v898
        %900 = vst.msk [vmem:[%s231] sm:$0xff] %vm549, %v852
        %901 = vst.msk [vmem:[%s231 + $0x8] sm:$0xff] %vm549, %v899
        %s902 = sand.u32 %s151, 1
        %s903 = scalar_lea.sflag [#allocation3], %s902
        %s904 = sand.u32 %s151, 1
        %s905 = smul.addr %s904, 16
        %s906 = scalar_lea.vmem [#allocation2], %s905
        // Predicated region
        $region41: #{tpu_custom_call.1} parent=39 // pred_check
          %p907 = pneg %p161
        $region42: #{tpu_custom_call.1} parent=39 // pred_check_branch
          %909 = sbr.rel (%p907) target = $region44
        $region43: #{tpu_custom_call.1} parent=39 // pred_region
          %s911 = ssub.s32 256, 256
          %912 = vsyncadd %s903, %s911
          %s913 = smul.addr %s24, 2
          %s914 = smul.addr %s23, 6
          %s915 = sadd.s32 %s913, %s914
          %s916 = smul.addr %s915, 128
          %s917 = scalar_lea.hbm %s5, %s916
          %s918 = sshll.u32 %s906, 4
          %s919 = int_to_ptr.vmem [resolvable:$true] %s918
          %924 = dma.vmem_to_hbm [thread:$0]  %s919, 256, %s917, %s903, 128, 128, 8
        $region44: #{tpu_custom_call.1} parent=39 // pred_fallthru
          _
      $region40: #{tpu_custom_call.1} parent=5 // pred_fallthru
        _
      %p925 = scmp.le.s32.totalorder 2, %s14
      // Predicated region
      $region45: #{tpu_custom_call.1} parent=5 // pred_check
        %p926 = pneg %p925
      $region46: #{tpu_custom_call.1} parent=5 // pred_check_branch
        %928 = sbr.rel (%p926) target = $region48
      $region47: #{tpu_custom_call.1} parent=5 // pred_region
        %s929 = ssub.s32 %s14, 2
        // Predicated region
        $region49: #{tpu_custom_call.1} parent=47 // pred_check
          %p930 = pneg %p167
        $region50: #{tpu_custom_call.1} parent=47 // pred_check_branch
          %932 = sbr.rel (%p930) target = $region52
        $region51: #{tpu_custom_call.1} parent=47 // pred_region
          %s933 = sand.u32 %s152, 1
          %s934 = scalar_lea.sflag [#allocation3], %s933
          %s935 = sand.u32 %s152, 1
          %s936 = smul.addr %s935, 16
          %s937 = scalar_lea.vmem [#allocation2], %s936
          %938 = dma.done %s934, 256
        $region52: #{tpu_custom_call.1} parent=47 // pred_fallthru
          _
      $region48: #{tpu_custom_call.1} parent=5 // pred_fallthru
        _
    $region6: #{tpu_custom_call.1} parent=1 // loop_footer
      %s18 = sadd.s32 1, %s14
    $region7: #{tpu_custom_call.1} parent=1 // loop_footer_branch
      %13 = sbr.rel target = $region3
    $region8: #{tpu_custom_call.1} parent=1 // loop_exit
      _
    %939 = vsyncpa [#allocation3], 1
    %s940 = scalar_lea.sflag [#allocation3], 1
    %941 = vsyncpa %s940, 1

// kernel: tpu_custom_call.1
$region0: #{tpu_custom_call.1}
  #allocation0 [shape = 'u32[]', space=smem, size = 0x4, offset = 0x4, fixed_abs, tag = 'smem constant byte address 0x4 - core index']
  #allocation1 [shape = 'u32[144,128]{1,0:T(1,128)}', space=vmem, size = 0x12000, scoped, tag = 'internal scratch']
  %s0 = inlined_call_operand.vmem [shape: f32[2,96,16], index: 0, kind: input, shape index: {}]
  %s1 = inlined_call_operand.vmem [shape: f32[3,96,16], index: 1, kind: input, shape index: {}]
  %s2 = inlined_call_operand.vmem [shape: f32[32,32], index: 2, kind: input, shape index: {}]
  %s3 = inlined_call_operand.vmem [shape: f32[16,16], index: 3, kind: input, shape index: {}]
  %s4 = inlined_call_operand.vmem [shape: f32[16,16], index: 4, kind: input, shape index: {}]
  %s5 = inlined_call_operand.hbm [shape: f32[2,3,16,16], index: 5, kind: output, shape index: {}]
  %s6 = sld [smem:[#allocation0]]
  $region53: #{tpu_custom_call.1} parent=0
    _
  %s8 = ssub.s32 1, %s6
  %s9 = scalar_select 0, %s8, %s6
  $region1: #{tpu_custom_call.1} parent=0
    #allocation2 [shape = 'u8[16384]{0}', space=vmem, size = 0x4000, scoped, tag = 'output window, operand 0']
    #allocation3 [shape = 's32[2]{0}', space=sflag, size = 0x8, scoped, tag = 'scoped memory for tpu_custom_call.1']
    %10 = vsyncpa [#allocation3], 0
    %s11 = scalar_lea.sflag [#allocation3], 1
    %12 = vsyncpa %s11, 0
    loop: start=0, step=1, limit=8
    $region2: #{tpu_custom_call.1} parent=1 // loop_pre_header
      _
    $region3: #{tpu_custom_call.1} parent=1 // loop_header
      %s14 = sphi 0, %s18
      %p15 = scmp.ge.s32.totalorder %s14, 8
      %s21 = sphi 0, %s33
      %s22 = sphi 0, %s29
      %s23 = sphi 0, %s21
      %s24 = sphi 0, %s22
      %s25 = sphi 0, %s23
      %s26 = sphi 0, %s24
      %s36 = sphi 0, %s38
      %s39 = sphi 0, %s36
      %s40 = sphi 0, %s39
      %s56 = sphi 0, %s40
      %s60 = sphi 0, %s60
      %s62 = sphi 0, %s60
      %s63 = sphi 0, %s62
      %s77 = sphi 0, %s63
      %s81 = sphi 0, %s81
      %s83 = sphi 0, %s81
      %s84 = sphi 0, %s83
      %s98 = sphi 0, %s84
      %s102 = sphi 0, %s102
      %s104 = sphi 0, %s102
      %s105 = sphi 0, %s104
      %s119 = sphi 0, %s105
      %s123 = sphi 0, %s123
      %s125 = sphi 0, %s123
      %s126 = sphi 0, %s125
      %s140 = sphi 0, %s126
      %s148 = sphi 0, %s150
      %s151 = sphi 0, %s148
      %s152 = sphi 0, %s151
      %s168 = sphi 0, %s152
    $region4: #{tpu_custom_call.1} parent=1 // loop_header_branch
      %17 = sbr.rel (%p15) target = $region8
    $region5: #{tpu_custom_call.1} parent=1 // loop_body
      %s19 = ssub.s32 %s14, 1
      %s20 = ssub.s32 %s14, 2
      %s27 = sadd.s32 1, %s22
      %p28 = scmp.ge.s32.totalorder %s27, 3
      %s29 = scalar_select %p28, 0, %s27
      %s30 = sadd.s32 1, %s21
      %s31 = scalar_select %p28, %s30, %s21
      %p32 = scmp.ge.s32.totalorder %s31, 2
      %s33 = scalar_select %p32, 0, %s31
      %s34 = ssub.s32 %s21, %s33
      %p35 = scmp.eq.s32.totalorder %s34, 0
      %s37 = sadd.s32 %s36, 1
      %s38 = scalar_select %p35, %s36, %s37
      %p41 = pneg %p35
      %p42 = scmp.eq.s32.totalorder %s14, 5
      %p43 = por %p41, %p42
      %p44 = scmp.ne.s32.totalorder %s36, %s39
      %p45 = scmp.eq.s32.totalorder %s14, 0
      %p46 = por %p44, %p45
      %p47 = scmp.ne.s32.totalorder %s36, %s39
      %p48 = scmp.eq.s32.totalorder %s19, 5
      %p49 = por %p47, %p48
      %p50 = scmp.ne.s32.totalorder %s39, %s40
      %p51 = scmp.eq.s32.totalorder %s19, 0
      %p52 = por %p50, %p51
      %p53 = scmp.ne.s32.totalorder %s39, %s40
      %p54 = scmp.eq.s32.totalorder %s20, 5
      %p55 = por %p53, %p54
      %p57 = scmp.ne.s32.totalorder %s40, %s56
      %p58 = scmp.eq.s32.totalorder %s20, 0
      %p59 = por %p57, %p58
      %s61 = sadd.s32 %s60, 1
      %p64 = scmp.eq.s32.totalorder %s14, 5
      %p65 = scmp.ne.s32.totalorder %s60, %s62
      %p66 = scmp.eq.s32.totalorder %s14, 0
      %p67 = por %p65, %p66
      %p68 = scmp.ne.s32.totalorder %s60, %s62
      %p69 = scmp.eq.s32.totalorder %s19, 5
      %p70 = por %p68, %p69
      %p71 = scmp.ne.s32.totalorder %s62, %s63
      %p72 = scmp.eq.s32.totalorder %s19, 0
      %p73 = por %p71, %p72
      %p74 = scmp.ne.s32.totalorder %s62, %s63
      %p75 = scmp.eq.s32.totalorder %s20, 5
      %p76 = por %p74, %p75
      %p78 = scmp.ne.s32.totalorder %s63, %s77
      %p79 = scmp.eq.s32.totalorder %s20, 0
      %p80 = por %p78, %p79
      %s82 = sadd.s32 %s81, 1
      %p85 = scmp.eq.s32.totalorder %s14, 5
      %p86 = scmp.ne.s32.totalorder %s81, %s83
      %p87 = scmp.eq.s32.totalorder %s14, 0
      %p88 = por %p86, %p87
      %p89 = scmp.ne.s32.totalorder %s81, %s83
      %p90 = scmp.eq.s32.totalorder %s19, 5
      %p91 = por %p89, %p90
      %p92 = scmp.ne.s32.totalorder %s83, %s84
      %p93 = scmp.eq.s32.totalorder %s19, 0
      %p94 = por %p92, %p93
      %p95 = scmp.ne.s32.totalorder %s83, %s84
      %p96 = scmp.eq.s32.totalorder %s20, 5
      %p97 = por %p95, %p96
      %p99 = scmp.ne.s32.totalorder %s84, %s98
      %p100 = scmp.eq.s32.totalorder %s20, 0
      %p101 = por %p99, %p100
      %s103 = sadd.s32 %s102, 1
      %p106 = scmp.eq.s32.totalorder %s14, 5
      %p107 = scmp.ne.s32.totalorder %s102, %s104
      %p108 = scmp.eq.s32.totalorder %s14, 0
      %p109 = por %p107, %p108
      %p110 = scmp.ne.s32.totalorder %s102, %s104
      %p111 = scmp.eq.s32.totalorder %s19, 5
      %p112 = por %p110, %p111
      %p113 = scmp.ne.s32.totalorder %s104, %s105
      %p114 = scmp.eq.s32.totalorder %s19, 0
      %p115 = por %p113, %p114
      %p116 = scmp.ne.s32.totalorder %s104, %s105
      %p117 = scmp.eq.s32.totalorder %s20, 5
      %p118 = por %p116, %p117
      %p120 = scmp.ne.s32.totalorder %s105, %s119
      %p121 = scmp.eq.s32.totalorder %s20, 0
      %p122 = por %p120, %p121
      %s124 = sadd.s32 %s123, 1
      %p127 = scmp.eq.s32.totalorder %s14, 5
      %p128 = scmp.ne.s32.totalorder %s123, %s125
      %p129 = scmp.eq.s32.totalorder %s14, 0
      %p130 = por %p128, %p129
      %p131 = scmp.ne.s32.totalorder %s123, %s125
      %p132 = scmp.eq.s32.totalorder %s19, 5
      %p133 = por %p131, %p132
      %p134 = scmp.ne.s32.totalorder %s125, %s126
      %p135 = scmp.eq.s32.totalorder %s19, 0
      %p136 = por %p134, %p135
      %p137 = scmp.ne.s32.totalorder %s125, %s126
      %p138 = scmp.eq.s32.totalorder %s20, 5
      %p139 = por %p137, %p138
      %p141 = scmp.ne.s32.totalorder %s126, %s140
      %p142 = scmp.eq.s32.totalorder %s20, 0
      %p143 = por %p141, %p142
      %s144 = ssub.s32 %s21, %s33
      %s145 = ssub.s32 %s22, %s29
      %s146 = sor.u32 %s144, %s145
      %p147 = scmp.eq.s32.totalorder %s146, 0
      %s149 = sadd.s32 %s148, 1
      %s150 = scalar_select %p147, %s148, %s149
      %p153 = pneg %p147
      %p154 = scmp.eq.s32.totalorder %s14, 5
      %p155 = por %p153, %p154
      %p156 = scmp.ne.s32.totalorder %s148, %s151
      %p157 = scmp.eq.s32.totalorder %s14, 0
      %p158 = por %p156, %p157
      %p159 = scmp.ne.s32.totalorder %s148, %s151
      %p160 = scmp.eq.s32.totalorder %s19, 5
      %p161 = por %p159, %p160
      %p162 = scmp.ne.s32.totalorder %s151, %s152
      %p163 = scmp.eq.s32.totalorder %s19, 0
      %p164 = por %p162, %p163
      %p165 = scmp.ne.s32.totalorder %s151, %s152
      %p166 = scmp.eq.s32.totalorder %s20, 5
      %p167 = por %p165, %p166
      %p169 = scmp.ne.s32.totalorder %s152, %s168
      %p170 = scmp.eq.s32.totalorder %s20, 0
      %p171 = por %p169, %p170
      %p172 = scmp.le.s32.totalorder 1, %s14
      %p173 = scmp.lt.s32.totalorder %s14, 7
      %p174 = pnand %p172, %p173
      %p175 = pneg %p174
      // Predicated region
      $region9: #{tpu_custom_call.1} parent=5 // pred_check
        _
      $region10: #{tpu_custom_call.1} parent=5 // pred_check_branch
        %177 = sbr.rel (%p174) target = $region12
      $region11: #{tpu_custom_call.1} parent=5 // pred_region
        %s178 = ssub.s32 %s14, 1
        // Predicated region
        $region13: #{tpu_custom_call.1} parent=11 // pred_check
          %p179 = pneg %p73
        $region14: #{tpu_custom_call.1} parent=11 // pred_check_branch
          %181 = sbr.rel (%p179) target = $region16
        $region15: #{tpu_custom_call.1} parent=11 // pred_region
          _
        $region16: #{tpu_custom_call.1} parent=11 // pred_fallthru
          _
        // Predicated region
        $region17: #{tpu_custom_call.1} parent=11 // pred_check
          %p182 = pneg %p94
        $region18: #{tpu_custom_call.1} parent=11 // pred_check_branch
          %184 = sbr.rel (%p182) target = $region20
        $region19: #{tpu_custom_call.1} parent=11 // pred_region
          _
        $region20: #{tpu_custom_call.1} parent=11 // pred_fallthru
          _
        // Predicated region
        $region21: #{tpu_custom_call.1} parent=11 // pred_check
          %p185 = pneg %p115
        $region22: #{tpu_custom_call.1} parent=11 // pred_check_branch
          %187 = sbr.rel (%p185) target = $region24
        $region23: #{tpu_custom_call.1} parent=11 // pred_region
          _
        $region24: #{tpu_custom_call.1} parent=11 // pred_fallthru
          _
        // Predicated region
        $region25: #{tpu_custom_call.1} parent=11 // pred_check
          %p188 = pneg %p136
        $region26: #{tpu_custom_call.1} parent=11 // pred_check_branch
          %190 = sbr.rel (%p188) target = $region28
        $region27: #{tpu_custom_call.1} parent=11 // pred_region
          _
        $region28: #{tpu_custom_call.1} parent=11 // pred_fallthru
          _
      $region12: #{tpu_custom_call.1} parent=5 // pred_fallthru
        _
      %p191 = scmp.lt.s32.totalorder %s14, 6
      // Predicated region
      $region29: #{tpu_custom_call.1} parent=5 // pred_check
        %p192 = pneg %p191
      $region30: #{tpu_custom_call.1} parent=5 // pred_check_branch
        %194 = sbr.rel (%p192) target = $region32
      $region31: #{tpu_custom_call.1} parent=5 // pred_region
        // Predicated region
        $region33: #{tpu_custom_call.1} parent=31 // pred_check
          %p195 = pneg %p46
        $region34: #{tpu_custom_call.1} parent=31 // pred_check_branch
          %197 = sbr.rel (%p195) target = $region36
        $region35: #{tpu_custom_call.1} parent=31 // pred_region
          %p198 = scmp.lt.s32.totalorder %s21, 1
          %s199 = scalar_select %p198, %s21, 1
          %s200 = smul.addr %s199, 12
          %s201 = smul.addr %s200, 8
          %s202 = scalar_lea.vmem %s0, %s201
        $region36: #{tpu_custom_call.1} parent=31 // pred_fallthru
          _
      $region32: #{tpu_custom_call.1} parent=5 // pred_fallthru
        _
      %p203 = scmp.le.s32.totalorder 1, %s14
      %p204 = scmp.lt.s32.totalorder %s14, 7
      %p205 = pnand %p203, %p204
      %p206 = pneg %p205
      // Predicated region
      $region37: #{tpu_custom_call.1} parent=5 // pred_check
        _
      $region38: #{tpu_custom_call.1} parent=5 // pred_check_branch
        %208 = sbr.rel (%p205) target = $region40
      $region39: #{tpu_custom_call.1} parent=5 // pred_region
        %s209 = ssub.s32 %s14, 1
        %p210 = scmp.lt.s32.totalorder %s23, 1
        %s211 = scalar_select %p210, %s23, 1
        %s212 = smul.addr %s211, 12
        %s213 = smul.addr %s212, 8
        %s214 = scalar_lea.vmem %s0, %s213
        %p215 = pneg %p52
        %p216 = pneg %p49
        %p217 = pneg %p73
        %p218 = pneg %p70
        %p219 = pneg %p94
        %p220 = pneg %p91
        %p221 = pneg %p115
        %p222 = pneg %p112
        %p223 = pneg %p136
        %p224 = pneg %p133
        %p225 = pneg %p164
        %p226 = pneg %p161
        %s227 = sand.u32 %s151, 1
        %s228 = scalar_lea.sflag [#allocation3], %s227
        %s229 = sand.u32 %s151, 1
        %s230 = smul.addr %s229, 16
        %s231 = scalar_lea.vmem [#allocation2], %s230
        %p232 = scmp.lt.s32.totalorder %s23, 1
        %s233 = scalar_select %p232, %s23, 1
        %s234 = smul.addr %s233, 12
        %s235 = smul.addr %s234, 8
        %s236 = scalar_lea.vmem %s0, %s235
        %s237 = smul.u32 %s24, 96
        %s238 = scalar_lea.vmem %s1, %s237
        %v239 = vld [vmem:[%s238] sm:$0xff]
        %v240 = vld [vmem:[%s238 + $0x8] sm:$0xff]
        %v241 = vld [vmem:[%s238 + $0x10] sm:$0xff]
        %v242 = vld [vmem:[%s238 + $0x18] sm:$0xff]
        %v243 = vld [vmem:[%s238 + $0x20] sm:$0xff]
        %v244 = vld [vmem:[%s238 + $0x28] sm:$0xff]
        %v245 = vld [vmem:[%s238 + $0x30] sm:$0xff]
        %v246 = vld [vmem:[%s238 + $0x38] sm:$0xff]
        %v247 = vld [vmem:[%s238 + $0x40] sm:$0xff]
        %v248 = vld [vmem:[%s238 + $0x48] sm:$0xff]
        %v249 = vld [vmem:[%s238 + $0x50] sm:$0xff]
        %v250 = vld [vmem:[%s238 + $0x58] sm:$0xff]
        %v251 = vld [vmem:[%s236] sm:$0xff]
        %v252 = vld [vmem:[%s236 + $0x8] sm:$0xff]
        %v253 = vld [vmem:[%s236 + $0x10] sm:$0xff]
        %v254 = vld [vmem:[%s236 + $0x18] sm:$0xff]
        %v255 = vld [vmem:[%s236 + $0x20] sm:$0xff]
        %v256 = vld [vmem:[%s236 + $0x28] sm:$0xff]
        %v257 = vld [vmem:[%s236 + $0x30] sm:$0xff]
        %v258 = vld [vmem:[%s236 + $0x38] sm:$0xff]
        %v259 = vld [vmem:[%s236 + $0x40] sm:$0xff]
        %v260 = vld [vmem:[%s236 + $0x48] sm:$0xff]
        %v261 = vld [vmem:[%s236 + $0x50] sm:$0xff]
        %v262 = vld [vmem:[%s236 + $0x58] sm:$0xff]
        %v263 = vmul.f32 %v239, %v251
        %v264 = vmul.f32 %v240, %v252
        %v265 = vmul.f32 %v241, %v253
        %v266 = vmul.f32 %v242, %v254
        %v267 = vmul.f32 %v243, %v255
        %v268 = vmul.f32 %v244, %v256
        %v269 = vmul.f32 %v245, %v257
        %v270 = vmul.f32 %v246, %v258
        %v271 = vmul.f32 %v247, %v259
        %v272 = vmul.f32 %v248, %v260
        %v273 = vmul.f32 %v249, %v261
        %v274 = vmul.f32 %v250, %v262
        %v275 = vld [vmem:[%s2] sm:$0xff]
        %v276 = vld [vmem:[%s2 + $0x8] sm:$0xff]
        %v277 = vld [vmem:[%s2 + $0x10] sm:$0xff]
        %v278 = vld [vmem:[%s2 + $0x18] sm:$0xff]
        %vm279 = vcmask 261120
        %v281 = vsel %vm279, %v275, 0
        %v284 = vsel %vm279, %v276, 0
        %v287 = vsel %vm279, %v277, 0
        %v290 = vsel %vm279, %v278, 0
        %292 = vmatprep.subr.mxu0 0.0
        %293 = vmatpush1.msra.mxu0 %v263
        %294 = vmatprep.subr.mxu0 0.0
        %295 = vmatpush1.msra.mxu0 %v264
        %296 = vmatprep.subr.mxu0 0.0
        %297 = vmatpush1.msra.mxu0 %v265
        %298 = vmatprep.subr.mxu0 0.0
        %299 = vmatpush1.msra.mxu0 %v266
        %300 = vmatprep.subr.mxu0 0.0
        %301 = vmatpush1.msra.mxu0 0.0
        %302 = vmatprep.subr.mxu0 0.0
        %303 = vmatpush1.msra.mxu0 0.0
        %304 = vmatprep.subr.mxu0 0.0
        %305 = vmatpush1.msra.mxu0 0.0
        %306 = vmatprep.subr.mxu0 0.0
        %307 = vmatpush1.msra.mxu0 0.0
        %308 = vmatprep.subr.mxu0 0.0
        %309 = vmatpush1.msra.mxu0 0.0
        %310 = vmatprep.subr.mxu0 0.0
        %311 = vmatpush1.msra.mxu0 0.0
        %312 = vmatprep.subr.mxu0 0.0
        %313 = vmatpush1.msra.mxu0 0.0
        %314 = vmatprep.subr.mxu0 0.0
        %315 = vmatpush1.msra.mxu0 0.0
        %316 = vmatprep.subr.mxu0 0.0
        %317 = vmatpush1.msra.mxu0 0.0
        %318 = vmatprep.subr.mxu0 0.0
        %319 = vmatpush1.msra.mxu0 0.0
        %320 = vmatprep.subr.mxu0 0.0
        %321 = vmatpush1.msra.mxu0 0.0
        %322 = vmatprep.subr.mxu0 0.0
        %323 = vmatpush1.msra.mxu0 0.0
        %324 = vmatprep.subr.mxu0 0.0
        %325 = vmatpush1.msra.mxu0 0.0
        %326 = vmatprep.subr.mxu0 0.0
        %327 = vmatpush1.msra.mxu0 0.0
        %328 = vmatprep.subr.mxu0 0.0
        %329 = vmatpush1.msra.mxu0 0.0
        %330 = vmatprep.subr.mxu0 0.0
        %331 = vmatpush1.msra.mxu0 0.0
        %332 = vmatprep.subr.mxu0 0.0
        %333 = vmatpush1.msra.mxu0 0.0
        %334 = vmatprep.subr.mxu0 0.0
        %335 = vmatpush1.msra.mxu0 0.0
        %336 = vmatprep.subr.mxu0 0.0
        %337 = vmatpush1.msra.mxu0 0.0
        %338 = vmatprep.subr.mxu0 0.0
        %339 = vmatpush1.msra.mxu0 0.0
        %340 = vmatprep.subr.mxu0 0.0
        %341 = vmatpush1.msra.mxu0 0.0
        %342 = vmatprep.subr.mxu0 0.0
        %343 = vmatpush1.msra.mxu0 0.0
        %344 = vmatprep.subr.mxu0 0.0
        %345 = vmatpush1.msra.mxu0 0.0
        %346 = vmatprep.subr.mxu0 0.0
        %347 = vmatpush1.msra.mxu0 0.0
        %348 = vmatprep.subr.mxu0 0.0
        %349 = vmatpush1.msra.mxu0 0.0
        %350 = vmatprep.subr.mxu0 0.0
        %351 = vmatpush1.msra.mxu0 0.0
        %352 = vmatprep.subr.mxu0 0.0
        %353 = vmatpush1.msra.mxu0 0.0
        %354 = vmatprep.subr.mxu0 0.0
        %355 = vmatpush1.msra.mxu0 0.0
        %356 = vmatprep.mubr.f32.mxu0 0.0
        %357 = vmatmul.mubr.f32.gmra.mrb[0].mxu0 %v281
        %v358 = vpop.f32.mrb[0].mxu0
        %v359 = vadd.f32 0.0, %v358
        %v360 = vpop.f32.mrb[0].mxu0
        %361 = vmatprep.mubr.f32.mxu0 0.0
        %362 = vmatmul.mubr.f32.gmra.mrb[0].mxu0 %v284
        %v363 = vpop.f32.mrb[0].mxu0
        %v364 = vadd.f32 0.0, %v363
        %v365 = vpop.f32.mrb[0].mxu0
        %366 = vmatprep.mubr.f32.mxu0 0.0
        %367 = vmatmul.mubr.f32.gmra.mrb[0].mxu0 %v287
        %v368 = vpop.f32.mrb[0].mxu0
        %v369 = vadd.f32 0.0, %v368
        %v370 = vpop.f32.mrb[0].mxu0
        %371 = vmatprep.mubr.f32.mxu0 0.0
        %372 = vmatmul.mubr.f32.gmra.mrb[0].mxu0 %v290
        %v373 = vpop.f32.mrb[0].mxu0
        %v374 = vadd.f32 0.0, %v373
        %v375 = vpop.f32.mrb[0].mxu0
        %376 = vdwg.mxu0
        %377 = vmatprep.subr.mxu0 0.0
        %378 = vmatpush1.msra.mxu0 %v267
        %379 = vmatprep.subr.mxu0 0.0
        %380 = vmatpush1.msra.mxu0 %v268
        %381 = vmatprep.subr.mxu0 0.0
        %382 = vmatpush1.msra.mxu0 %v269
        %383 = vmatprep.subr.mxu0 0.0
        %384 = vmatpush1.msra.mxu0 %v270
        %385 = vmatprep.subr.mxu0 0.0
        %386 = vmatpush1.msra.mxu0 0.0
        %387 = vmatprep.subr.mxu0 0.0
        %388 = vmatpush1.msra.mxu0 0.0
        %389 = vmatprep.subr.mxu0 0.0
        %390 = vmatpush1.msra.mxu0 0.0
        %391 = vmatprep.subr.mxu0 0.0
        %392 = vmatpush1.msra.mxu0 0.0
        %393 = vmatprep.subr.mxu0 0.0
        %394 = vmatpush1.msra.mxu0 0.0
        %395 = vmatprep.subr.mxu0 0.0
        %396 = vmatpush1.msra.mxu0 0.0
        %397 = vmatprep.subr.mxu0 0.0
        %398 = vmatpush1.msra.mxu0 0.0
        %399 = vmatprep.subr.mxu0 0.0
        %400 = vmatpush1.msra.mxu0 0.0
        %401 = vmatprep.subr.mxu0 0.0
        %402 = vmatpush1.msra.mxu0 0.0
        %403 = vmatprep.subr.mxu0 0.0
        %404 = vmatpush1.msra.mxu0 0.0
        %405 = vmatprep.subr.mxu0 0.0
        %406 = vmatpush1.msra.mxu0 0.0
        %407 = vmatprep.subr.mxu0 0.0
        %408 = vmatpush1.msra.mxu0 0.0
        %409 = vmatprep.subr.mxu0 0.0
        %410 = vmatpush1.msra.mxu0 0.0
        %411 = vmatprep.subr.mxu0 0.0
        %412 = vmatpush1.msra.mxu0 0.0
        %413 = vmatprep.subr.mxu0 0.0
        %414 = vmatpush1.msra.mxu0 0.0
        %415 = vmatprep.subr.mxu0 0.0
        %416 = vmatpush1.msra.mxu0 0.0
        %417 = vmatprep.subr.mxu0 0.0
        %418 = vmatpush1.msra.mxu0 0.0
        %419 = vmatprep.subr.mxu0 0.0
        %420 = vmatpush1.msra.mxu0 0.0
        %421 = vmatprep.subr.mxu0 0.0
        %422 = vmatpush1.msra.mxu0 0.0
        %423 = vmatprep.subr.mxu0 0.0
        %424 = vmatpush1.msra.mxu0 0.0
        %425 = vmatprep.subr.mxu0 0.0
        %426 = vmatpush1.msra.mxu0 0.0
        %427 = vmatprep.subr.mxu0 0.0
        %428 = vmatpush1.msra.mxu0 0.0
        %429 = vmatprep.subr.mxu0 0.0
        %430 = vmatpush1.msra.mxu0 0.0
        %431 = vmatprep.subr.mxu0 0.0
        %432 = vmatpush1.msra.mxu0 0.0
        %433 = vmatprep.subr.mxu0 0.0
        %434 = vmatpush1.msra.mxu0 0.0
        %435 = vmatprep.subr.mxu0 0.0
        %436 = vmatpush1.msra.mxu0 0.0
        %437 = vmatprep.subr.mxu0 0.0
        %438 = vmatpush1.msra.mxu0 0.0
        %439 = vmatprep.subr.mxu0 0.0
        %440 = vmatpush1.msra.mxu0 0.0
        %441 = vmatprep.mubr.f32.mxu0 0.0
        %442 = vmatmul.mubr.f32.gmra.mrb[0].mxu0 %v281
        %v443 = vpop.f32.mrb[0].mxu0
        %v444 = vadd.f32 0.0, %v443
        %v445 = vpop.f32.mrb[0].mxu0
        %446 = vmatprep.mubr.f32.mxu0 0.0
        %447 = vmatmul.mubr.f32.gmra.mrb[0].mxu0 %v284
        %v448 = vpop.f32.mrb[0].mxu0
        %v449 = vadd.f32 0.0, %v448
        %v450 = vpop.f32.mrb[0].mxu0
        %451 = vmatprep.mubr.f32.mxu0 0.0
        %452 = vmatmul.mubr.f32.gmra.mrb[0].mxu0 %v287
        %v453 = vpop.f32.mrb[0].mxu0
        %v454 = vadd.f32 0.0, %v453
        %v455 = vpop.f32.mrb[0].mxu0
        %456 = vmatprep.mubr.f32.mxu0 0.0
        %457 = vmatmul.mubr.f32.gmra.mrb[0].mxu0 %v290
        %v458 = vpop.f32.mrb[0].mxu0
        %v459 = vadd.f32 0.0, %v458
        %v460 = vpop.f32.mrb[0].mxu0
        %461 = vdwg.mxu0
        %462 = vmatprep.subr.mxu0 0.0
        %463 = vmatpush1.msra.mxu0 %v271
        %464 = vmatprep.subr.mxu0 0.0
        %465 = vmatpush1.msra.mxu0 %v272
        %466 = vmatprep.subr.mxu0 0.0
        %467 = vmatpush1.msra.mxu0 %v273
        %468 = vmatprep.subr.mxu0 0.0
        %469 = vmatpush1.msra.mxu0 %v274
        %470 = vmatprep.subr.mxu0 0.0
        %471 = vmatpush1.msra.mxu0 0.0
        %472 = vmatprep.subr.mxu0 0.0
        %473 = vmatpush1.msra.mxu0 0.0
        %474 = vmatprep.subr.mxu0 0.0
        %475 = vmatpush1.msra.mxu0 0.0
        %476 = vmatprep.subr.mxu0 0.0
        %477 = vmatpush1.msra.mxu0 0.0
        %478 = vmatprep.subr.mxu0 0.0
        %479 = vmatpush1.msra.mxu0 0.0
        %480 = vmatprep.subr.mxu0 0.0
        %481 = vmatpush1.msra.mxu0 0.0
        %482 = vmatprep.subr.mxu0 0.0
        %483 = vmatpush1.msra.mxu0 0.0
        %484 = vmatprep.subr.mxu0 0.0
        %485 = vmatpush1.msra.mxu0 0.0
        %486 = vmatprep.subr.mxu0 0.0
        %487 = vmatpush1.msra.mxu0 0.0
        %488 = vmatprep.subr.mxu0 0.0
        %489 = vmatpush1.msra.mxu0 0.0
        %490 = vmatprep.subr.mxu0 0.0
        %491 = vmatpush1.msra.mxu0 0.0
        %492 = vmatprep.subr.mxu0 0.0
        %493 = vmatpush1.msra.mxu0 0.0
        %494 = vmatprep.subr.mxu0 0.0
        %495 = vmatpush1.msra.mxu0 0.0
        %496 = vmatprep.subr.mxu0 0.0
        %497 = vmatpush1.msra.mxu0 0.0
        %498 = vmatprep.subr.mxu0 0.0
        %499 = vmatpush1.msra.mxu0 0.0
        %500 = vmatprep.subr.mxu0 0.0
        %501 = vmatpush1.msra.mxu0 0.0
        %502 = vmatprep.subr.mxu0 0.0
        %503 = vmatpush1.msra.mxu0 0.0
        %504 = vmatprep.subr.mxu0 0.0
        %505 = vmatpush1.msra.mxu0 0.0
        %506 = vmatprep.subr.mxu0 0.0
        %507 = vmatpush1.msra.mxu0 0.0
        %508 = vmatprep.subr.mxu0 0.0
        %509 = vmatpush1.msra.mxu0 0.0
        %510 = vmatprep.subr.mxu0 0.0
        %511 = vmatpush1.msra.mxu0 0.0
        %512 = vmatprep.subr.mxu0 0.0
        %513 = vmatpush1.msra.mxu0 0.0
        %514 = vmatprep.subr.mxu0 0.0
        %515 = vmatpush1.msra.mxu0 0.0
        %516 = vmatprep.subr.mxu0 0.0
        %517 = vmatpush1.msra.mxu0 0.0
        %518 = vmatprep.subr.mxu0 0.0
        %519 = vmatpush1.msra.mxu0 0.0
        %520 = vmatprep.subr.mxu0 0.0
        %521 = vmatpush1.msra.mxu0 0.0
        %522 = vmatprep.subr.mxu0 0.0
        %523 = vmatpush1.msra.mxu0 0.0
        %524 = vmatprep.subr.mxu0 0.0
        %525 = vmatpush1.msra.mxu0 0.0
        %526 = vmatprep.mubr.f32.mxu0 0.0
        %527 = vmatmul.mubr.f32.gmra.mrb[0].mxu0 %v281
        %v528 = vpop.f32.mrb[0].mxu0
        %v529 = vadd.f32 0.0, %v528
        %v530 = vpop.f32.mrb[0].mxu0
        %531 = vmatprep.mubr.f32.mxu0 0.0
        %532 = vmatmul.mubr.f32.gmra.mrb[0].mxu0 %v284
        %v533 = vpop.f32.mrb[0].mxu0
        %v534 = vadd.f32 0.0, %v533
        %v535 = vpop.f32.mrb[0].mxu0
        %536 = vmatprep.mubr.f32.mxu0 0.0
        %537 = vmatmul.mubr.f32.gmra.mrb[0].mxu0 %v287
        %v538 = vpop.f32.mrb[0].mxu0
        %v539 = vadd.f32 0.0, %v538
        %v540 = vpop.f32.mrb[0].mxu0
        %541 = vmatprep.mubr.f32.mxu0 0.0
        %542 = vmatmul.mubr.f32.gmra.mrb[0].mxu0 %v290
        %v543 = vpop.f32.mrb[0].mxu0
        %v544 = vadd.f32 0.0, %v543
        %v545 = vpop.f32.mrb[0].mxu0
        %546 = vdwg.mxu0
        %v547 = vld [vmem:[%s3] sm:$0xff]
        %v548 = vld [vmem:[%s3 + $0x8] sm:$0xff]
        %vm549 = vcmask 130048
        %v551 = vsel %vm549, %v359, 0
        %v554 = vsel %vm549, %v364, 0
        %v557 = vsel %vm549, %v444, 0
        %v560 = vsel %vm549, %v449, 0
        %v563 = vsel %vm549, %v529, 0
        %v566 = vsel %vm549, %v534, 0
        %568 = vmatprep.subr.mxu0 0.0
        %569 = vmatpush1.msra.mxu0 %v547
        %570 = vmatprep.subr.mxu0 0.0
        %571 = vmatpush1.msra.mxu0 %v548
        %572 = vmatprep.subr.mxu0 0.0
        %573 = vmatpush1.msra.mxu0 0.0
        %574 = vmatprep.subr.mxu0 0.0
        %575 = vmatpush1.msra.mxu0 0.0
        %576 = vmatprep.subr.mxu0 0.0
        %577 = vmatpush1.msra.mxu0 0.0
        %578 = vmatprep.subr.mxu0 0.0
        %579 = vmatpush1.msra.mxu0 0.0
        %580 = vmatprep.subr.mxu0 0.0
        %581 = vmatpush1.msra.mxu0 0.0
        %582 = vmatprep.subr.mxu0 0.0
        %583 = vmatpush1.msra.mxu0 0.0
        %584 = vmatprep.subr.mxu0 0.0
        %585 = vmatpush1.msra.mxu0 0.0
        %586 = vmatprep.subr.mxu0 0.0
        %587 = vmatpush1.msra.mxu0 0.0
        %588 = vmatprep.subr.mxu0 0.0
        %589 = vmatpush1.msra.mxu0 0.0
        %590 = vmatprep.subr.mxu0 0.0
        %591 = vmatpush1.msra.mxu0 0.0
        %592 = vmatprep.subr.mxu0 0.0
        %593 = vmatpush1.msra.mxu0 0.0
        %594 = vmatprep.subr.mxu0 0.0
        %595 = vmatpush1.msra.mxu0 0.0
        %596 = vmatprep.subr.mxu0 0.0
        %597 = vmatpush1.msra.mxu0 0.0
        %598 = vmatprep.subr.mxu0 0.0
        %599 = vmatpush1.msra.mxu0 0.0
        %600 = vmatprep.subr.mxu0 0.0
        %601 = vmatpush1.msra.mxu0 0.0
        %602 = vmatprep.subr.mxu0 0.0
        %603 = vmatpush1.msra.mxu0 0.0
        %604 = vmatprep.subr.mxu0 0.0
        %605 = vmatpush1.msra.mxu0 0.0
        %606 = vmatprep.subr.mxu0 0.0
        %607 = vmatpush1.msra.mxu0 0.0
        %608 = vmatprep.subr.mxu0 0.0
        %609 = vmatpush1.msra.mxu0 0.0
        %610 = vmatprep.subr.mxu0 0.0
        %611 = vmatpush1.msra.mxu0 0.0
        %612 = vmatprep.subr.mxu0 0.0
        %613 = vmatpush1.msra.mxu0 0.0
        %614 = vmatprep.subr.mxu0 0.0
        %615 = vmatpush1.msra.mxu0 0.0
        %616 = vmatprep.subr.mxu0 0.0
        %617 = vmatpush1.msra.mxu0 0.0
        %618 = vmatprep.subr.mxu0 0.0
        %619 = vmatpush1.msra.mxu0 0.0
        %620 = vmatprep.subr.mxu0 0.0
        %621 = vmatpush1.msra.mxu0 0.0
        %622 = vmatprep.subr.mxu0 0.0
        %623 = vmatpush1.msra.mxu0 0.0
        %624 = vmatprep.subr.mxu0 0.0
        %625 = vmatpush1.msra.mxu0 0.0
        %626 = vmatprep.subr.mxu0 0.0
        %627 = vmatpush1.msra.mxu0 0.0
        %628 = vmatprep.subr.mxu0 0.0
        %629 = vmatpush1.msra.mxu0 0.0
        %630 = vmatprep.subr.mxu0 0.0
        %631 = vmatpush1.msra.mxu0 0.0
        %632 = vmatprep.mubr.f32.mxu0 0.0
        %633 = vmatmul.mubr.f32.gmra.mrb[0].mxu0 %v551
        %v634 = vpop.f32.mrb[0].mxu0
        %v635 = vadd.f32 0.0, %v634
        %v636 = vpop.f32.mrb[0].mxu0
        %637 = vmatprep.mubr.f32.mxu0 0.0
        %638 = vmatmul.mubr.f32.gmra.mrb[0].mxu0 %v554
        %v639 = vpop.f32.mrb[0].mxu0
        %v640 = vadd.f32 0.0, %v639
        %v641 = vpop.f32.mrb[0].mxu0
        %642 = vmatprep.mubr.f32.mxu0 0.0
        %643 = vmatmul.mubr.f32.gmra.mrb[0].mxu0 %v557
        %v644 = vpop.f32.mrb[0].mxu0
        %v645 = vadd.f32 0.0, %v644
        %v646 = vpop.f32.mrb[0].mxu0
        %647 = vmatprep.mubr.f32.mxu0 0.0
        %648 = vmatmul.mubr.f32.gmra.mrb[0].mxu0 %v560
        %v649 = vpop.f32.mrb[0].mxu0
        %v650 = vadd.f32 0.0, %v649
        %v651 = vpop.f32.mrb[0].mxu0
        %652 = vmatprep.mubr.f32.mxu0 0.0
        %653 = vmatmul.mubr.f32.gmra.mrb[0].mxu0 %v563
        %v654 = vpop.f32.mrb[0].mxu0
        %v655 = vadd.f32 0.0, %v654
        %v656 = vpop.f32.mrb[0].mxu0
        %657 = vmatprep.mubr.f32.mxu0 0.0
        %658 = vmatmul.mubr.f32.gmra.mrb[0].mxu0 %v566
        %v659 = vpop.f32.mrb[0].mxu0
        %v660 = vadd.f32 0.0, %v659
        %v661 = vpop.f32.mrb[0].mxu0
        %662 = vdwg.mxu0
        %v663 = vld [vmem:[%s4] sm:$0xff]
        %v664 = vld [vmem:[%s4 + $0x8] sm:$0xff]
        %v666 = vsel %vm549, %v369, 0
        %v669 = vsel %vm549, %v374, 0
        %v672 = vsel %vm549, %v454, 0
        %v675 = vsel %vm549, %v459, 0
        %v678 = vsel %vm549, %v539, 0
        %v681 = vsel %vm549, %v544, 0
        %683 = vmatprep.subr.mxu0 0.0
        %684 = vmatpush1.msra.mxu0 %v663
        %685 = vmatprep.subr.mxu0 0.0
        %686 = vmatpush1.msra.mxu0 %v664
        %687 = vmatprep.subr.mxu0 0.0
        %688 = vmatpush1.msra.mxu0 0.0
        %689 = vmatprep.subr.mxu0 0.0
        %690 = vmatpush1.msra.mxu0 0.0
        %691 = vmatprep.subr.mxu0 0.0
        %692 = vmatpush1.msra.mxu0 0.0
        %693 = vmatprep.subr.mxu0 0.0
        %694 = vmatpush1.msra.mxu0 0.0
        %695 = vmatprep.subr.mxu0 0.0
        %696 = vmatpush1.msra.mxu0 0.0
        %697 = vmatprep.subr.mxu0 0.0
        %698 = vmatpush1.msra.mxu0 0.0
        %699 = vmatprep.subr.mxu0 0.0
        %700 = vmatpush1.msra.mxu0 0.0
        %701 = vmatprep.subr.mxu0 0.0
        %702 = vmatpush1.msra.mxu0 0.0
        %703 = vmatprep.subr.mxu0 0.0
        %704 = vmatpush1.msra.mxu0 0.0
        %705 = vmatprep.subr.mxu0 0.0
        %706 = vmatpush1.msra.mxu0 0.0
        %707 = vmatprep.subr.mxu0 0.0
        %708 = vmatpush1.msra.mxu0 0.0
        %709 = vmatprep.subr.mxu0 0.0
        %710 = vmatpush1.msra.mxu0 0.0
        %711 = vmatprep.subr.mxu0 0.0
        %712 = vmatpush1.msra.mxu0 0.0
        %713 = vmatprep.subr.mxu0 0.0
        %714 = vmatpush1.msra.mxu0 0.0
        %715 = vmatprep.subr.mxu0 0.0
        %716 = vmatpush1.msra.mxu0 0.0
        %717 = vmatprep.subr.mxu0 0.0
        %718 = vmatpush1.msra.mxu0 0.0
        %719 = vmatprep.subr.mxu0 0.0
        %720 = vmatpush1.msra.mxu0 0.0
        %721 = vmatprep.subr.mxu0 0.0
        %722 = vmatpush1.msra.mxu0 0.0
        %723 = vmatprep.subr.mxu0 0.0
        %724 = vmatpush1.msra.mxu0 0.0
        %725 = vmatprep.subr.mxu0 0.0
        %726 = vmatpush1.msra.mxu0 0.0
        %727 = vmatprep.subr.mxu0 0.0
        %728 = vmatpush1.msra.mxu0 0.0
        %729 = vmatprep.subr.mxu0 0.0
        %730 = vmatpush1.msra.mxu0 0.0
        %731 = vmatprep.subr.mxu0 0.0
        %732 = vmatpush1.msra.mxu0 0.0
        %733 = vmatprep.subr.mxu0 0.0
        %734 = vmatpush1.msra.mxu0 0.0
        %735 = vmatprep.subr.mxu0 0.0
        %736 = vmatpush1.msra.mxu0 0.0
        %737 = vmatprep.subr.mxu0 0.0
        %738 = vmatpush1.msra.mxu0 0.0
        %739 = vmatprep.subr.mxu0 0.0
        %740 = vmatpush1.msra.mxu0 0.0
        %741 = vmatprep.subr.mxu0 0.0
        %742 = vmatpush1.msra.mxu0 0.0
        %743 = vmatprep.subr.mxu0 0.0
        %744 = vmatpush1.msra.mxu0 0.0
        %745 = vmatprep.subr.mxu0 0.0
        %746 = vmatpush1.msra.mxu0 0.0
        %747 = vmatprep.mubr.f32.mxu0 0.0
        %748 = vmatmul.mubr.f32.gmra.mrb[0].mxu0 %v666
        %v749 = vpop.f32.mrb[0].mxu0
        %v750 = vadd.f32 0.0, %v749
        %v751 = vpop.f32.mrb[0].mxu0
        %752 = vmatprep.mubr.f32.mxu0 0.0
        %753 = vmatmul.mubr.f32.gmra.mrb[0].mxu0 %v669
        %v754 = vpop.f32.mrb[0].mxu0
        %v755 = vadd.f32 0.0, %v754
        %v756 = vpop.f32.mrb[0].mxu0
        %757 = vmatprep.mubr.f32.mxu0 0.0
        %758 = vmatmul.mubr.f32.gmra.mrb[0].mxu0 %v672
        %v759 = vpop.f32.mrb[0].mxu0
        %v760 = vadd.f32 0.0, %v759
        %v761 = vpop.f32.mrb[0].mxu0
        %762 = vmatprep.mubr.f32.mxu0 0.0
        %763 = vmatmul.mubr.f32.gmra.mrb[0].mxu0 %v675
        %v764 = vpop.f32.mrb[0].mxu0
        %v765 = vadd.f32 0.0, %v764
        %v766 = vpop.f32.mrb[0].mxu0
        %767 = vmatprep.mubr.f32.mxu0 0.0
        %768 = vmatmul.mubr.f32.gmra.mrb[0].mxu0 %v678
        %v769 = vpop.f32.mrb[0].mxu0
        %v770 = vadd.f32 0.0, %v769
        %v771 = vpop.f32.mrb[0].mxu0
        %772 = vmatprep.mubr.f32.mxu0 0.0
        %773 = vmatmul.mubr.f32.gmra.mrb[0].mxu0 %v681
        %v774 = vpop.f32.mrb[0].mxu0
        %v775 = vadd.f32 0.0, %v774
        %v776 = vpop.f32.mrb[0].mxu0
        %777 = vdwg.mxu0
        %v778 = vsub.f32 %v635, %v750
        %v779 = vsub.f32 %v640, %v755
        %v780 = vsub.f32 %v645, %v760
        %v781 = vsub.f32 %v650, %v765
        %v782 = vsub.f32 %v655, %v770
        %v783 = vsub.f32 %v660, %v775
        %v784 = vmul.f32 %v780, %v780
        %v785 = vmul.f32 %v781, %v781
        %v786 = vmul.f32 %v782, %v782
        %v787 = vmul.f32 %v783, %v783
        %v788 = vadd.f32 %v784, %v786
        %v789 = vadd.f32 %v785, %v787
        %v790 = vrsqrt.pop %v788
        %v791 = vmul.f32 %v788, %v790
        %vm792 = vcmp.eq.f32.partialorder %v788, inf
        %v793 = vsel %vm792, %v788, %v791
        %vm794 = vcmp.eq.f32.partialorder %v788, 0.0
        %v795 = vand.u32 %v788, 2147483648
        %v796 = vsel %vm794, %v795, %v793
        %v797 = vrsqrt.pop %v789
        %v798 = vmul.f32 %v789, %v797
        %vm799 = vcmp.eq.f32.partialorder %v789, inf
        %v800 = vsel %vm799, %v789, %v798
        %vm801 = vcmp.eq.f32.partialorder %v789, 0.0
        %v802 = vand.u32 %v789, 2147483648
        %v803 = vsel %vm801, %v802, %v800
        %v804 = vadd.f32 %v796, 1e-06
        %v805 = vadd.f32 %v803, 1e-06
        %v806 = vand.u32 2147483647, %v804
        %v807 = vand.u32 2147483647, %v778
        %v808 = vmin.f32 %v806, %v807
        %v809 = vmax.f32 %v806, %v807
        %v810 = vrcp.pop %v809
        %v811 = vmul.f32 %v808, %v810
        %v812 = vmul.f32 %v811, %v811
        %v813 = vmul.f32 0.002785687, %v812
        %v814 = vadd.f32 %v813, -0.015866
        %v815 = vmul.f32 %v814, %v812
        %v816 = vadd.f32 %v815, 0.04247222
        %v817 = vmul.f32 %v816, %v812
        %v818 = vadd.f32 %v817, -0.074975304
        %v819 = vmul.f32 %v818, %v812
        %v820 = vadd.f32 %v819, 0.1064488
        %v821 = vmul.f32 %v820, %v812
        %v822 = vadd.f32 %v821, -0.14207031
        %v823 = vmul.f32 %v822, %v812
        %v824 = vadd.f32 %v823, 0.19993454
        %v825 = vmul.f32 %v824, %v812
        %v826 = vadd.f32 %v825, -0.33333147
        %v827 = vmul.f32 %v826, %v812
        %v828 = vmul.f32 %v827, %v811
        %v829 = vadd.f32 %v828, %v811
        %vm830 = vcmp.gt.f32.partialorder %v807, %v806
        %v831 = vsub.f32 1.5707964, %v829
        %v832 = vsel %vm830, %v831, %v829
        %vm833 = vcmp.lt.f32.partialorder %v804, 0.0
        %v834 = vsub.f32 3.1415927, %v832
        %v835 = vsel %vm833, %v834, %v832
        %vm836 = vcmp.lt.s32.totalorder %v804, 0
        %v837 = vsel %vm836, 3.1415927, 0.0
        %vm838 = vcmp.eq.f32.partialorder %v778, 0.0
        %v839 = vsel %vm838, %v837, %v835
        %vm840 = vcmp.ne.f32.partialorder %v804, %v804
        %vm841 = vcmp.ne.f32.partialorder %v778, %v778
        %vm842 = vmor %vm840, %vm841
        %v843 = vsel %vm842, nan, %v839
        %vm844 = vcmp.lt.f32.partialorder %v804, 0.0
        %v845 = vsel %vm844, 2.3561945, 0.7853982
        %vm846 = vcmp.eq.s32.totalorder %v806, inf
        %vm847 = vcmp.eq.s32.totalorder %v807, inf
        %vm848 = vmand %vm846, %vm847
        %v849 = vsel %vm848, %v845, %v843
        %v850 = vand.u32 2147483647, %v849
        %v851 = vand.u32 %v778, 2147483648
        %v852 = vor.u32 %v850, %v851
        %v853 = vand.u32 2147483647, %v805
        %v854 = vand.u32 2147483647, %v779
        %v855 = vmin.f32 %v853, %v854
        %v856 = vmax.f32 %v853, %v854
        %v857 = vrcp.pop %v856
        %v858 = vmul.f32 %v855, %v857
        %v859 = vmul.f32 %v858, %v858
        %v860 = vmul.f32 0.002785687, %v859
        %v861 = vadd.f32 %v860, -0.015866
        %v862 = vmul.f32 %v861, %v859
        %v863 = vadd.f32 %v862, 0.04247222
        %v864 = vmul.f32 %v863, %v859
        %v865 = vadd.f32 %v864, -0.074975304
        %v866 = vmul.f32 %v865, %v859
        %v867 = vadd.f32 %v866, 0.1064488
        %v868 = vmul.f32 %v867, %v859
        %v869 = vadd.f32 %v868, -0.14207031
        %v870 = vmul.f32 %v869, %v859
        %v871 = vadd.f32 %v870, 0.19993454
        %v872 = vmul.f32 %v871, %v859
        %v873 = vadd.f32 %v872, -0.33333147
        %v874 = vmul.f32 %v873, %v859
        %v875 = vmul.f32 %v874, %v858
        %v876 = vadd.f32 %v875, %v858
        %vm877 = vcmp.gt.f32.partialorder %v854, %v853
        %v878 = vsub.f32 1.5707964, %v876
        %v879 = vsel %vm877, %v878, %v876
        %vm880 = vcmp.lt.f32.partialorder %v805, 0.0
        %v881 = vsub.f32 3.1415927, %v879
        %v882 = vsel %vm880, %v881, %v879
        %vm883 = vcmp.lt.s32.totalorder %v805, 0
        %v884 = vsel %vm883, 3.1415927, 0.0
        %vm885 = vcmp.eq.f32.partialorder %v779, 0.0
        %v886 = vsel %vm885, %v884, %v882
        %vm887 = vcmp.ne.f32.partialorder %v805, %v805
        %vm888 = vcmp.ne.f32.partialorder %v779, %v779
        %vm889 = vmor %vm887, %vm888
        %v890 = vsel %vm889, nan, %v886
        %vm891 = vcmp.lt.f32.partialorder %v805, 0.0
        %v892 = vsel %vm891, 2.3561945, 0.7853982
        %vm893 = vcmp.eq.s32.totalorder %v853, inf
        %vm894 = vcmp.eq.s32.totalorder %v854, inf
        %vm895 = vmand %vm893, %vm894
        %v896 = vsel %vm895, %v892, %v890
        %v897 = vand.u32 2147483647, %v896
        %v898 = vand.u32 %v779, 2147483648
        %v899 = vor.u32 %v897, %v898
        %900 = vst.msk [vmem:[%s231] sm:$0xff] %vm549, %v852
        %901 = vst.msk [vmem:[%s231 + $0x8] sm:$0xff] %vm549, %v899
        %s902 = sand.u32 %s151, 1
        %s903 = scalar_lea.sflag [#allocation3], %s902
        %s904 = sand.u32 %s151, 1
        %s905 = smul.addr %s904, 16
        %s906 = scalar_lea.vmem [#allocation2], %s905
        // Predicated region
        $region41: #{tpu_custom_call.1} parent=39 // pred_check
          %p907 = pneg %p161
        $region42: #{tpu_custom_call.1} parent=39 // pred_check_branch
          %909 = sbr.rel (%p907) target = $region44
        $region43: #{tpu_custom_call.1} parent=39 // pred_region
          %s911 = ssub.s32 256, 256
          %912 = vsyncadd %s903, %s911
          %s913 = smul.addr %s24, 2
          %s914 = smul.addr %s23, 6
          %s915 = sadd.s32 %s913, %s914
          %s916 = smul.addr %s915, 128
          %s917 = scalar_lea.hbm %s5, %s916
          %s918 = sshll.u32 %s906, 4
          %s919 = int_to_ptr.vmem [resolvable:$true] %s918
          %924 = dma.vmem_to_hbm [thread:$0]  %s919, 256, %s917, %s903, 128, 128, 8
        $region44: #{tpu_custom_call.1} parent=39 // pred_fallthru
          _
      $region40: #{tpu_custom_call.1} parent=5 // pred_fallthru
        _
      %p925 = scmp.le.s32.totalorder 2, %s14
      // Predicated region
      $region45: #{tpu_custom_call.1} parent=5 // pred_check
        %p926 = pneg %p925
      $region46: #{tpu_custom_call.1} parent=5 // pred_check_branch
        %928 = sbr.rel (%p926) target = $region48
      $region47: #{tpu_custom_call.1} parent=5 // pred_region
        %s929 = ssub.s32 %s14, 2
        // Predicated region
        $region49: #{tpu_custom_call.1} parent=47 // pred_check
          %p930 = pneg %p167
        $region50: #{tpu_custom_call.1} parent=47 // pred_check_branch
          %932 = sbr.rel (%p930) target = $region52
        $region51: #{tpu_custom_call.1} parent=47 // pred_region
          %s933 = sand.u32 %s152, 1
          %s934 = scalar_lea.sflag [#allocation3], %s933
          %s935 = sand.u32 %s152, 1
          %s936 = smul.addr %s935, 16
          %s937 = scalar_lea.vmem [#allocation2], %s936
          %938 = dma.done %s934, 256
        $region52: #{tpu_custom_call.1} parent=47 // pred_fallthru
          _
      $region48: #{tpu_custom_call.1} parent=5 // pred_fallthru
        _
    $region6: #{tpu_custom_call.1} parent=1 // loop_footer
      %s18 = sadd.s32 1, %s14
    $region7: #{tpu_custom_call.1} parent=1 // loop_footer_branch
      %13 = sbr.rel target = $region3
    $region8: #{tpu_custom_call.1} parent=1 // loop_exit
      _
    %939 = vsyncpa [#allocation3], 1
    %s940 = scalar_lea.sflag [#allocation3], 1
    %941 = vsyncpa %s940, 1

</llo_original>
